<compile_context>
chip_gen: v5e
topology: v5e:2x2
jax: 0.10.0
libtpu: 0.0.40
codegen_flags: <defaults>
</compile_context>

<pallas_src>
import jax
import jax.numpy as jnp
from jax.experimental import pallas as pl
from jax.experimental.pallas import tpu as pltpu


def add_conv1x1_kernel(a_ref, b_ref, w_ref, o_ref):
    # a_ref, b_ref: (M, Cin)  f32 activations (spatial-major rows, lane-dense Cin)
    # w_ref:        (Cin, TN) weight tile (bf16 or f32), lane-dense TN
    # o_ref:        (M, TN)   f32 output tile, lane-dense TN
    x = a_ref[...] + b_ref[...]                      # fused add in f32 (VPU)
    w = w_ref[...].astype(jnp.float32)               # upcast narrow weight; overlaps weight DMA
    o_ref[...] = jnp.dot(x, w, preferred_element_type=jnp.float32)   # MXU, f32 accumulation


def prepare_conv1x1_weight(weight, dtype=jnp.bfloat16):
    """One-time weight prep: PyTorch (Cout, Cin, 1, 1) -> (Cin, Cout) in `dtype`.

    bf16 storage is a deliberate numerics choice: the weight is ~75% of this kernel's HBM
    traffic, so narrowing it is the dominant bandwidth saving. Pass dtype=jnp.float32 to keep
    exact f32 semantics. Call this ONCE (outside the hot jitted forward) and reuse the result.
    """
    cout, cin = weight.shape[0], weight.shape[1]
    w2d = jnp.asarray(weight).reshape(cout, cin)
    return jnp.transpose(w2d, (1, 0)).astype(dtype)          # (Cin, Cout)


def _default_num_cout_blocks():
    # Single-TC chips (v5e/v6e): 2-3 blocks so weight prefetch overlaps compute + writeback.
    # Multi-TC chips (v7x, megacore v4/v5p): 2 "parallel" blocks, one per core.
    # Unknown device kind: default to 2 (never silently 1 -> would idle a core on v7x).
    try:
        kind = jax.devices()[0].device_kind.lower()
    except Exception:
        return 2
    if "v5e" in kind or "v5 lite" in kind or "v5lite" in kind:
        return 3    # slowest HBM: more latency to hide, per-step overhead amortizes better
    return 2


def _pick_num_cout_blocks(cout, requested):
    # Tiles must stay lane-dense (multiple of 128) and evenly divide Cout.
    for nb in (requested, 2, 1):
        if nb >= 1 and cout % nb == 0 and (cout // nb) % 128 == 0:
            return nb
    return 1


def fused_add_conv1x1(x_a, x_b, w_cn, *, num_cout_blocks=None):
    """conv2d_1x1(x_a + x_b, weight), stride 1, no bias.

    x_a, x_b : (N, Cin, H, W) float32 (NCHW, PyTorch layout)
    w_cn     : (Cin, Cout) weight from prepare_conv1x1_weight (bf16 or f32)
    returns  : (N, Cout, H, W) float32
    """
    N, Cin, H, W = x_a.shape
    Cout = w_cn.shape[1]
    M = N * H * W

    # NCHW -> (M, Cin): tiny (~75 KB each) wrapper transposes buy lane-dense kernel I/O.
    a2 = jnp.transpose(x_a, (0, 2, 3, 1)).reshape(M, Cin)
    b2 = jnp.transpose(x_b, (0, 2, 3, 1)).reshape(M, Cin)

    if num_cout_blocks is None:
        num_cout_blocks = _default_num_cout_blocks()
    num_cout_blocks = _pick_num_cout_blocks(Cout, num_cout_blocks)
    tn = Cout // num_cout_blocks

    w_bytes = Cout * Cin * jnp.dtype(w_cn.dtype).itemsize
    cost = pl.CostEstimate(
        flops=2 * M * Cin * Cout,
        transcendentals=0,
        bytes_accessed=2 * Cin * M * 4 + w_bytes + Cout * M * 4,
    )

    out2d = pl.pallas_call(
        add_conv1x1_kernel,
        out_shape=jax.ShapeDtypeStruct((M, Cout), jnp.float32),
        grid_spec=pltpu.PrefetchScalarGridSpec(
            num_scalar_prefetch=0,
            grid=(num_cout_blocks,),
            in_specs=[
                pl.BlockSpec((M, Cin), lambda j: (0, 0)),     # fetched once, revisited
                pl.BlockSpec((M, Cin), lambda j: (0, 0)),
                pl.BlockSpec((Cin, tn), lambda j: (0, j)),    # streamed per block
            ],
            out_specs=pl.BlockSpec((M, tn), lambda j: (0, j)),
        ),
        compiler_params=pltpu.CompilerParams(
            dimension_semantics=("parallel",)),
        cost_estimate=cost,
    )(a2, b2, w_cn)

    # (M, Cout) -> NCHW. The ~441 KB transpose lives in the wrapper so kernel stores stay
    # lane-dense (per measured Pallas data this is the biggest single lever at this size).
    return jnp.transpose(out2d.reshape(N, H, W, Cout), (0, 3, 1, 2))


if __name__ == "__main__":
    key = jax.random.PRNGKey(0)
    k1, k2, k3 = jax.random.split(key, 3)

    # Shapes implied by the module: x782, x767: (1, 384, 7, 7); weight: (2304, 384, 1, 1)
    N, Cin, H, W = 1, 384, 7, 7
    Cout = 2304

    x782 = jax.random.normal(k1, (N, Cin, H, W), dtype=jnp.float32)
    x767 = jax.random.normal(k2, (N, Cin, H, W), dtype=jnp.float32)
    fan_in = Cin * 1 * 1
    bound = (1.0 / fan_in) ** 0.5
    weight = jax.random.uniform(k3, (Cout, Cin, 1, 1), dtype=jnp.float32,
                                minval=-bound, maxval=bound)

    # One-time weight prep (outside the jitted forward; bf16 halves the dominant HBM term).
    w_cn = prepare_conv1x1_weight(weight, dtype=jnp.bfloat16)

    fwd = jax.jit(fused_add_conv1x1)
    out = fwd(x782, x767, w_cn)
    out = jax.block_until_ready(out)
    assert out.shape == (N, Cout, H, W)

    # Check 1: kernel plumbing vs a reference using the same (bf16-quantized) weight.
    x_sum = x782 + x767
    ref_q = jnp.einsum("co,nchw->nohw", w_cn.astype(jnp.float32), x_sum,
                       precision=jax.lax.Precision.HIGHEST)
    assert jnp.allclose(out, ref_q, atol=2e-2, rtol=2e-2), "kernel mismatch"

    # Check 2: module semantics preserved up to the explicit bf16 weight quantization.
    ref_f32 = jnp.einsum("oc,nchw->nohw", weight.reshape(Cout, Cin), x_sum,
                         precision=jax.lax.Precision.HIGHEST)
    assert jnp.allclose(out, ref_f32, atol=3e-2, rtol=3e-2), "quantization drift too large"

    print("KERNEL_OK")
</pallas_src>

<mosaic_0001>
module attributes {stable_mosaic.version = 11 : i64} {
  func.func @add_conv1x1_kernel(%arg0: i32, %arg1: memref<49x384xf32, #tpu.memory_space<vmem>>, %arg2: memref<49x384xf32, #tpu.memory_space<vmem>>, %arg3: memref<384x1152xbf16, #tpu.memory_space<vmem>>, %arg4: memref<49x1152xf32, #tpu.memory_space<vmem>>) attributes {dimension_semantics = [#tpu.dimension_semantics<parallel>], iteration_bounds = array<i64: 2>, scalar_prefetch = 0 : i64, scratch_operands = 0 : i64, tpu.core_type = #tpu.core_type<tc>, window_params = [{pipeline_mode = #tpu.pipeline_mode<synchronous>, transform_indices = @transform_0, window_bounds = array<i64: 49, 384>}, {pipeline_mode = #tpu.pipeline_mode<synchronous>, transform_indices = @transform_1, window_bounds = array<i64: 49, 384>}, {transform_indices = @transform_2, window_bounds = array<i64: 384, 1152>}, {transform_indices = @transform_3, window_bounds = array<i64: 49, 1152>}]} {
    %c0 = arith.constant 0 : index
    %c0_0 = arith.constant 0 : index
    %0 = vector.load %arg1[%c0, %c0_0] : memref<49x384xf32, #tpu.memory_space<vmem>>, vector<49x384xf32>
    %c0_1 = arith.constant 0 : index
    %c0_2 = arith.constant 0 : index
    %1 = vector.load %arg2[%c0_1, %c0_2] : memref<49x384xf32, #tpu.memory_space<vmem>>, vector<49x384xf32>
    %2 = arith.addf %0, %1 : vector<49x384xf32>
    %c0_3 = arith.constant 0 : index
    %c0_4 = arith.constant 0 : index
    %3 = vector.load %arg3[%c0_3, %c0_4] : memref<384x1152xbf16, #tpu.memory_space<vmem>>, vector<384x1152xbf16>
    %4 = arith.extf %3 : vector<384x1152xbf16> to vector<384x1152xf32>
    %cst = arith.constant dense<0.000000e+00> : vector<49x1152xf32>
    %5 = tpu.matmul %2, %4, %cst {dimension_numbers = #tpu.dot_dimension_numbers<[1], [0], [0], [1], [0, 0, 1, 1], [], []>} : vector<49x384xf32>, vector<384x1152xf32>, vector<49x1152xf32> -> vector<49x1152xf32>
    %c0_5 = arith.constant 0 : index
    %c0_6 = arith.constant 0 : index
    %6 = vector.load %arg4[%c0_5, %c0_6] : memref<49x1152xf32, #tpu.memory_space<vmem>>, vector<49x1152xf32>
    tpu.vector_store %arg4[%c0_5, %c0_6], %5 {strides = array<i32>} : memref<49x1152xf32, #tpu.memory_space<vmem>>, vector<49x1152xf32>,
    return
  }
  func.func @transform_0(%arg0: i32) -> (i32, i32) {
    %c0_i32 = arith.constant 0 : i32
    %c0_i32_0 = arith.constant 0 : i32
    %c0_i32_1 = arith.constant 0 : i32
    return %c0_i32, %c0_i32_0 : i32, i32
  }
  func.func @transform_1(%arg0: i32) -> (i32, i32) {
    %c0_i32 = arith.constant 0 : i32
    %c0_i32_0 = arith.constant 0 : i32
    %c0_i32_1 = arith.constant 0 : i32
    return %c0_i32, %c0_i32_0 : i32, i32
  }
  func.func @transform_2(%arg0: i32) -> (i32, i32) {
    %c0_i32 = arith.constant 0 : i32
    %c0_i32_0 = arith.constant 0 : i32
    return %c0_i32, %arg0 : i32, i32
  }
  func.func @transform_3(%arg0: i32) -> (i32, i32) {
    %c0_i32 = arith.constant 0 : i32
    %c0_i32_0 = arith.constant 0 : i32
    return %c0_i32, %arg0 : i32, i32
  }
}

</mosaic_0001>

<llo_original>
// kernel: fused_add_conv1x1.1
$region0: #{fused_add_conv1x1.1}
  #allocation0 [shape = 'u32[]', space=smem, size = 0x4, offset = 0x4, fixed_abs, tag = 'smem constant byte address 0x4 - core index']
  #allocation1 [shape = 'u32[72,128]{1,0:T(1,128)}', space=vmem, size = 0x9000, scoped, tag = 'internal scratch']
  %s0 = inlined_call_operand.vmem [shape: f32[49,384], index: 0, kind: input, shape index: {}]
  %s1 = inlined_call_operand.vmem [shape: f32[49,384], index: 1, kind: input, shape index: {}]
  %s2 = inlined_call_operand.hbm [shape: bf16[384,2304], index: 2, kind: input, shape index: {}]
  %s3 = inlined_call_operand.vmem [shape: f32[49,2304], index: 3, kind: output, shape index: {}]
  %s4 = sld [smem:[#allocation0]]
  $region68: #{fused_add_conv1x1.1} parent=0
    _
  %s6 = ssub.s32 1, %s4
  %s7 = scalar_select 0, %s6, %s4
  $region1: #{fused_add_conv1x1.1} parent=0
    #allocation2 [shape = 'u8[1769472]{0}', space=vmem, size = 0x1b0000, scoped, tag = 'input window, operand 2']
    #allocation3 [shape = 's32[2]{0}', space=sflag, size = 0x8, scoped, tag = 'scoped memory for fused_add_conv1x1.1']
    #allocation4 [shape = 'u8[516096]{0}', space=vmem, size = 0x7e000, scoped, tag = 'output window, operand 0']
    %8 = vsyncpa [#allocation3], 0
    %s9 = scalar_lea.sflag [#allocation3], 1
    %10 = vsyncpa %s9, 0
    loop: start=0, step=1, limit=4
    $region2: #{fused_add_conv1x1.1} parent=1 // loop_pre_header
      _
    $region3: #{fused_add_conv1x1.1} parent=1 // loop_header
      %s12 = sphi 0, %s16
      %p13 = scmp.ge.s32.totalorder %s12, 4
      %s20 = sphi 0, %s20
      %s22 = sphi 0, %s20
      %s23 = sphi 0, %s22
      %s37 = sphi 0, %s23
      %s41 = sphi 0, %s41
      %s43 = sphi 0, %s41
      %s44 = sphi 0, %s43
      %s58 = sphi 0, %s44
      %s64 = sphi 0, %s66
      %s67 = sphi 0, %s64
      %s68 = sphi 0, %s67
      %s84 = sphi 0, %s68
      %s90 = sphi 0, %s92
      %s93 = sphi 0, %s90
      %s94 = sphi 0, %s93
      %s110 = sphi 0, %s94
    $region4: #{fused_add_conv1x1.1} parent=1 // loop_header_branch
      %15 = sbr.rel (%p13) target = $region8
    $region5: #{fused_add_conv1x1.1} parent=1 // loop_body
      %s17 = ssub.s32 %s12, 1
      %s18 = ssub.s32 %s12, 2
      %s19 = sadd.s32 %s12, 1
      %s21 = sadd.s32 %s20, 1
      %p24 = scmp.eq.s32.totalorder %s12, 1
      %p25 = scmp.ne.s32.totalorder %s20, %s22
      %p26 = scmp.eq.s32.totalorder %s12, 0
      %p27 = por %p25, %p26
      %p28 = scmp.ne.s32.totalorder %s20, %s22
      %p29 = scmp.eq.s32.totalorder %s17, 1
      %p30 = por %p28, %p29
      %p31 = scmp.ne.s32.totalorder %s22, %s23
      %p32 = scmp.eq.s32.totalorder %s17, 0
      %p33 = por %p31, %p32
      %p34 = scmp.ne.s32.totalorder %s22, %s23
      %p35 = scmp.eq.s32.totalorder %s18, 1
      %p36 = por %p34, %p35
      %p38 = scmp.ne.s32.totalorder %s23, %s37
      %p39 = scmp.eq.s32.totalorder %s18, 0
      %p40 = por %p38, %p39
      %s42 = sadd.s32 %s41, 1
      %p45 = scmp.eq.s32.totalorder %s12, 1
      %p46 = scmp.ne.s32.totalorder %s41, %s43
      %p47 = scmp.eq.s32.totalorder %s12, 0
      %p48 = por %p46, %p47
      %p49 = scmp.ne.s32.totalorder %s41, %s43
      %p50 = scmp.eq.s32.totalorder %s17, 1
      %p51 = por %p49, %p50
      %p52 = scmp.ne.s32.totalorder %s43, %s44
      %p53 = scmp.eq.s32.totalorder %s17, 0
      %p54 = por %p52, %p53
      %p55 = scmp.ne.s32.totalorder %s43, %s44
      %p56 = scmp.eq.s32.totalorder %s18, 1
      %p57 = por %p55, %p56
      %p59 = scmp.ne.s32.totalorder %s44, %s58
      %p60 = scmp.eq.s32.totalorder %s18, 0
      %p61 = por %p59, %p60
      %s62 = ssub.s32 %s12, %s19
      %p63 = scmp.eq.s32.totalorder %s62, 0
      %s65 = sadd.s32 %s64, 1
      %s66 = scalar_select %p63, %s64, %s65
      %p69 = pneg %p63
      %p70 = scmp.eq.s32.totalorder %s12, 1
      %p71 = por %p69, %p70
      %p72 = scmp.ne.s32.totalorder %s64, %s67
      %p73 = scmp.eq.s32.totalorder %s12, 0
      %p74 = por %p72, %p73
      %p75 = scmp.ne.s32.totalorder %s64, %s67
      %p76 = scmp.eq.s32.totalorder %s17, 1
      %p77 = por %p75, %p76
      %p78 = scmp.ne.s32.totalorder %s67, %s68
      %p79 = scmp.eq.s32.totalorder %s17, 0
      %p80 = por %p78, %p79
      %p81 = scmp.ne.s32.totalorder %s67, %s68
      %p82 = scmp.eq.s32.totalorder %s18, 1
      %p83 = por %p81, %p82
      %p85 = scmp.ne.s32.totalorder %s68, %s84
      %p86 = scmp.eq.s32.totalorder %s18, 0
      %p87 = por %p85, %p86
      %s88 = ssub.s32 %s12, %s19
      %p89 = scmp.eq.s32.totalorder %s88, 0
      %s91 = sadd.s32 %s90, 1
      %s92 = scalar_select %p89, %s90, %s91
      %p95 = pneg %p89
      %p96 = scmp.eq.s32.totalorder %s12, 1
      %p97 = por %p95, %p96
      %p98 = scmp.ne.s32.totalorder %s90, %s93
      %p99 = scmp.eq.s32.totalorder %s12, 0
      %p100 = por %p98, %p99
      %p101 = scmp.ne.s32.totalorder %s90, %s93
      %p102 = scmp.eq.s32.totalorder %s17, 1
      %p103 = por %p101, %p102
      %p104 = scmp.ne.s32.totalorder %s93, %s94
      %p105 = scmp.eq.s32.totalorder %s17, 0
      %p106 = por %p104, %p105
      %p107 = scmp.ne.s32.totalorder %s93, %s94
      %p108 = scmp.eq.s32.totalorder %s18, 1
      %p109 = por %p107, %p108
      %p111 = scmp.ne.s32.totalorder %s94, %s110
      %p112 = scmp.eq.s32.totalorder %s18, 0
      %p113 = por %p111, %p112
      %p114 = scmp.le.s32.totalorder 1, %s12
      %p115 = scmp.lt.s32.totalorder %s12, 3
      %p116 = pnand %p114, %p115
      %p117 = pneg %p116
      // Predicated region
      $region9: #{fused_add_conv1x1.1} parent=5 // pred_check
        _
      $region10: #{fused_add_conv1x1.1} parent=5 // pred_check_branch
        %119 = sbr.rel (%p116) target = $region12
      $region11: #{fused_add_conv1x1.1} parent=5 // pred_region
        %s120 = ssub.s32 %s12, 1
        // Predicated region
        $region13: #{fused_add_conv1x1.1} parent=11 // pred_check
          %p121 = pneg %p33
        $region14: #{fused_add_conv1x1.1} parent=11 // pred_check_branch
          %123 = sbr.rel (%p121) target = $region16
        $region15: #{fused_add_conv1x1.1} parent=11 // pred_region
          _
        $region16: #{fused_add_conv1x1.1} parent=11 // pred_fallthru
          _
        // Predicated region
        $region17: #{fused_add_conv1x1.1} parent=11 // pred_check
          %p124 = pneg %p54
        $region18: #{fused_add_conv1x1.1} parent=11 // pred_check_branch
          %126 = sbr.rel (%p124) target = $region20
        $region19: #{fused_add_conv1x1.1} parent=11 // pred_region
          _
        $region20: #{fused_add_conv1x1.1} parent=11 // pred_fallthru
          _
      $region12: #{fused_add_conv1x1.1} parent=5 // pred_fallthru
        _
      %p127 = scmp.lt.s32.totalorder %s12, 2
      // Predicated region
      $region21: #{fused_add_conv1x1.1} parent=5 // pred_check
        %p128 = pneg %p127
      $region22: #{fused_add_conv1x1.1} parent=5 // pred_check_branch
        %130 = sbr.rel (%p128) target = $region24
      $region23: #{fused_add_conv1x1.1} parent=5 // pred_region
        // Predicated region
        $region25: #{fused_add_conv1x1.1} parent=23 // pred_check
          %p131 = pneg %p74
        $region26: #{fused_add_conv1x1.1} parent=23 // pred_check_branch
          %133 = sbr.rel (%p131) target = $region28
        $region27: #{fused_add_conv1x1.1} parent=23 // pred_region
          %s134 = sand.u32 %s64, 1
          %s135 = scalar_lea.sflag [#allocation3], %s134
          %s136 = sand.u32 %s64, 1
          %s137 = smul.addr %s136, 1728
          %s138 = scalar_lea.vmem [#allocation2], %s137
          %s139 = smul.u32 9, %s12
          %141 = vsyncadd %s135, 0
          %s142 = smul.addr %s139, 4
          %s143 = scalar_lea.hbm %s2, %s142
          %s144 = sshll.u32 %s143, 4
          %s145 = int_to_ptr.hbm [resolvable:$true] %s144
          %s146 = sshll.u32 %s138, 4
          %s147 = int_to_ptr.vmem [resolvable:$true] %s146
          %152 = dma.hbm_to_vmem [thread:$0]  %s145, 27648, %s147, %s135, 1152, 576, 36
        $region28: #{fused_add_conv1x1.1} parent=23 // pred_fallthru
          _
      $region24: #{fused_add_conv1x1.1} parent=5 // pred_fallthru
        _
      %p153 = scmp.le.s32.totalorder 1, %s12
      %p154 = scmp.lt.s32.totalorder %s12, 3
      %p155 = pnand %p153, %p154
      %p156 = pneg %p155
      // Predicated region
      $region29: #{fused_add_conv1x1.1} parent=5 // pred_check
        _
      $region30: #{fused_add_conv1x1.1} parent=5 // pred_check_branch
        %158 = sbr.rel (%p155) target = $region32
      $region31: #{fused_add_conv1x1.1} parent=5 // pred_region
        %s159 = ssub.s32 %s12, 1
        %s160 = sand.u32 %s67, 1
        %s161 = scalar_lea.sflag [#allocation3], %s160
        %s162 = sand.u32 %s67, 1
        %s163 = smul.addr %s162, 1728
        %s164 = scalar_lea.vmem [#allocation2], %s163
        // Predicated region
        $region33: #{fused_add_conv1x1.1} parent=31 // pred_check
          %p165 = pneg %p80
        $region34: #{fused_add_conv1x1.1} parent=31 // pred_check_branch
          %167 = sbr.rel (%p165) target = $region36
        $region35: #{fused_add_conv1x1.1} parent=31 // pred_region
          %169 = dma.done %s161, 27648
        $region36: #{fused_add_conv1x1.1} parent=31 // pred_fallthru
          _
        %p170 = pneg %p33
        %p171 = pneg %p30
        %p172 = pneg %p54
        %p173 = pneg %p51
        %s174 = sand.u32 %s67, 1
        %s175 = scalar_lea.sflag [#allocation3], %s174
        %s176 = sand.u32 %s67, 1
        %s177 = smul.addr %s176, 1728
        %s178 = scalar_lea.vmem [#allocation2], %s177
        %p179 = pneg %p80
        %p180 = pneg %p77
        %p181 = pneg %p106
        %p182 = pneg %p103
        %s183 = sand.u32 %s93, 1
        %s184 = sand.u32 %s93, 1
        %s185 = smul.addr %s184, 504
        %s186 = scalar_lea.vmem [#allocation4], %s185
        %s187 = smul.u32 9, %s17
        %s188 = smul.u32 9, %s17
        %v189 = vld [vmem:[%s0] sm:$0xff]
        %v190 = vld [vmem:[%s0 + $0x8] sm:$0xff]
        %v191 = vld [vmem:[%s0 + $0x10] sm:$0xff]
        %v192 = vld [vmem:[%s0 + $0x18] sm:$0xff]
        %v193 = vld [vmem:[%s0 + $0x20] sm:$0xff]
        %v194 = vld [vmem:[%s0 + $0x28] sm:$0xff]
        %v195 = vld [vmem:[%s0 + $0x30] sm:$0xff]
        %v196 = vld [vmem:[%s0 + $0x38] sm:$0xff]
        %v197 = vld [vmem:[%s0 + $0x40] sm:$0xff]
        %v198 = vld [vmem:[%s0 + $0x48] sm:$0xff]
        %v199 = vld [vmem:[%s0 + $0x50] sm:$0xff]
        %v200 = vld [vmem:[%s0 + $0x58] sm:$0xff]
        %v201 = vld [vmem:[%s0 + $0x60] sm:$0xff]
        %v202 = vld [vmem:[%s0 + $0x68] sm:$0xff]
        %v203 = vld [vmem:[%s0 + $0x70] sm:$0xff]
        %v204 = vld [vmem:[%s0 + $0x78] sm:$0xff]
        %v205 = vld [vmem:[%s0 + $0x80] sm:$0xff]
        %v206 = vld [vmem:[%s0 + $0x88] sm:$0xff]
        %v207 = vld [vmem:[%s0 + $0x90] sm:$0x1]
        %v208 = vld [vmem:[%s0 + $0x98] sm:$0x1]
        %v209 = vld [vmem:[%s0 + $0xa0] sm:$0x1]
        %v210 = vld [vmem:[%s1] sm:$0xff]
        %v211 = vld [vmem:[%s1 + $0x8] sm:$0xff]
        %v212 = vld [vmem:[%s1 + $0x10] sm:$0xff]
        %v213 = vld [vmem:[%s1 + $0x18] sm:$0xff]
        %v214 = vld [vmem:[%s1 + $0x20] sm:$0xff]
        %v215 = vld [vmem:[%s1 + $0x28] sm:$0xff]
        %v216 = vld [vmem:[%s1 + $0x30] sm:$0xff]
        %v217 = vld [vmem:[%s1 + $0x38] sm:$0xff]
        %v218 = vld [vmem:[%s1 + $0x40] sm:$0xff]
        %v219 = vld [vmem:[%s1 + $0x48] sm:$0xff]
        %v220 = vld [vmem:[%s1 + $0x50] sm:$0xff]
        %v221 = vld [vmem:[%s1 + $0x58] sm:$0xff]
        %v222 = vld [vmem:[%s1 + $0x60] sm:$0xff]
        %v223 = vld [vmem:[%s1 + $0x68] sm:$0xff]
        %v224 = vld [vmem:[%s1 + $0x70] sm:$0xff]
        %v225 = vld [vmem:[%s1 + $0x78] sm:$0xff]
        %v226 = vld [vmem:[%s1 + $0x80] sm:$0xff]
        %v227 = vld [vmem:[%s1 + $0x88] sm:$0xff]
        %v228 = vld [vmem:[%s1 + $0x90] sm:$0x1]
        %v229 = vld [vmem:[%s1 + $0x98] sm:$0x1]
        %v230 = vld [vmem:[%s1 + $0xa0] sm:$0x1]
        %v231 = vadd.f32 %v189, %v210
        %v232 = vadd.f32 %v190, %v211
        %v233 = vadd.f32 %v191, %v212
        %v234 = vadd.f32 %v192, %v213
        %v235 = vadd.f32 %v193, %v214
        %v236 = vadd.f32 %v194, %v215
        %v237 = vadd.f32 %v195, %v216
        %v238 = vadd.f32 %v196, %v217
        %v239 = vadd.f32 %v197, %v218
        %v240 = vadd.f32 %v198, %v219
        %v241 = vadd.f32 %v199, %v220
        %v242 = vadd.f32 %v200, %v221
        %v243 = vadd.f32 %v201, %v222
        %v244 = vadd.f32 %v202, %v223
        %v245 = vadd.f32 %v203, %v224
        %v246 = vadd.f32 %v204, %v225
        %v247 = vadd.f32 %v205, %v226
        %v248 = vadd.f32 %v206, %v227
        %v249 = vadd.f32 %v207, %v228
        %v250 = vadd.f32 %v208, %v229
        %v251 = vadd.f32 %v209, %v230
        %v252 = vld [vmem:[%s164] sm:$0xff]
        %v253 = vld [vmem:[%s164 + $0x8] sm:$0xff]
        %v254 = vld [vmem:[%s164 + $0x10] sm:$0xff]
        %v255 = vld [vmem:[%s164 + $0x18] sm:$0xff]
        %v256 = vld [vmem:[%s164 + $0x20] sm:$0xf]
        %v257 = vld [vmem:[%s164 + $0x24] sm:$0xff]
        %v258 = vld [vmem:[%s164 + $0x2c] sm:$0xff]
        %v259 = vld [vmem:[%s164 + $0x34] sm:$0xff]
        %v260 = vld [vmem:[%s164 + $0x3c] sm:$0xff]
        %v261 = vld [vmem:[%s164 + $0x44] sm:$0xf]
        %v262 = vld [vmem:[%s164 + $0x48] sm:$0xff]
        %v263 = vld [vmem:[%s164 + $0x50] sm:$0xff]
        %v264 = vld [vmem:[%s164 + $0x58] sm:$0xff]
        %v265 = vld [vmem:[%s164 + $0x60] sm:$0xff]
        %v266 = vld [vmem:[%s164 + $0x68] sm:$0xf]
        %v267 = vld [vmem:[%s164 + $0x6c] sm:$0xff]
        %v268 = vld [vmem:[%s164 + $0x74] sm:$0xff]
        %v269 = vld [vmem:[%s164 + $0x7c] sm:$0xff]
        %v270 = vld [vmem:[%s164 + $0x84] sm:$0xff]
        %v271 = vld [vmem:[%s164 + $0x8c] sm:$0xf]
        %v272 = vld [vmem:[%s164 + $0x90] sm:$0xff]
        %v273 = vld [vmem:[%s164 + $0x98] sm:$0xff]
        %v274 = vld [vmem:[%s164 + $0xa0] sm:$0xff]
        %v275 = vld [vmem:[%s164 + $0xa8] sm:$0xff]
        %v276 = vld [vmem:[%s164 + $0xb0] sm:$0xf]
        %v277 = vld [vmem:[%s164 + $0xb4] sm:$0xff]
        %v278 = vld [vmem:[%s164 + $0xbc] sm:$0xff]
        %v279 = vld [vmem:[%s164 + $0xc4] sm:$0xff]
        %v280 = vld [vmem:[%s164 + $0xcc] sm:$0xff]
        %v281 = vld [vmem:[%s164 + $0xd4] sm:$0xf]
        %v282 = vld [vmem:[%s164 + $0xd8] sm:$0xff]
        %v283 = vld [vmem:[%s164 + $0xe0] sm:$0xff]
        %v284 = vld [vmem:[%s164 + $0xe8] sm:$0xff]
        %v285 = vld [vmem:[%s164 + $0xf0] sm:$0xff]
        %v286 = vld [vmem:[%s164 + $0xf8] sm:$0xf]
        %v287 = vld [vmem:[%s164 + $0xfc] sm:$0xff]
        %v288 = vld [vmem:[%s164 + $0x104] sm:$0xff]
        %v289 = vld [vmem:[%s164 + $0x10c] sm:$0xff]
        %v290 = vld [vmem:[%s164 + $0x114] sm:$0xff]
        %v291 = vld [vmem:[%s164 + $0x11c] sm:$0xf]
        %v292 = vld [vmem:[%s164 + $0x120] sm:$0xff]
        %v293 = vld [vmem:[%s164 + $0x128] sm:$0xff]
        %v294 = vld [vmem:[%s164 + $0x130] sm:$0xff]
        %v295 = vld [vmem:[%s164 + $0x138] sm:$0xff]
        %v296 = vld [vmem:[%s164 + $0x140] sm:$0xf]
        %v297 = vld [vmem:[%s164 + $0x144] sm:$0xff]
        %v298 = vld [vmem:[%s164 + $0x14c] sm:$0xff]
        %v299 = vld [vmem:[%s164 + $0x154] sm:$0xff]
        %v300 = vld [vmem:[%s164 + $0x15c] sm:$0xff]
        %v301 = vld [vmem:[%s164 + $0x164] sm:$0xf]
        %v302 = vld [vmem:[%s164 + $0x168] sm:$0xff]
        %v303 = vld [vmem:[%s164 + $0x170] sm:$0xff]
        %v304 = vld [vmem:[%s164 + $0x178] sm:$0xff]
        %v305 = vld [vmem:[%s164 + $0x180] sm:$0xff]
        %v306 = vld [vmem:[%s164 + $0x188] sm:$0xf]
        %v307 = vld [vmem:[%s164 + $0x18c] sm:$0xff]
        %v308 = vld [vmem:[%s164 + $0x194] sm:$0xff]
        %v309 = vld [vmem:[%s164 + $0x19c] sm:$0xff]
        %v310 = vld [vmem:[%s164 + $0x1a4] sm:$0xff]
        %v311 = vld [vmem:[%s164 + $0x1ac] sm:$0xf]
        %v312 = vld [vmem:[%s164 + $0x1b0] sm:$0xff]
        %v313 = vld [vmem:[%s164 + $0x1b8] sm:$0xff]
        %v314 = vld [vmem:[%s164 + $0x1c0] sm:$0xff]
        %v315 = vld [vmem:[%s164 + $0x1c8] sm:$0xff]
        %v316 = vld [vmem:[%s164 + $0x1d0] sm:$0xf]
        %v317 = vld [vmem:[%s164 + $0x1d4] sm:$0xff]
        %v318 = vld [vmem:[%s164 + $0x1dc] sm:$0xff]
        %v319 = vld [vmem:[%s164 + $0x1e4] sm:$0xff]
        %v320 = vld [vmem:[%s164 + $0x1ec] sm:$0xff]
        %v321 = vld [vmem:[%s164 + $0x1f4] sm:$0xf]
        %v322 = vld [vmem:[%s164 + $0x1f8] sm:$0xff]
        %v323 = vld [vmem:[%s164 + $0x200] sm:$0xff]
        %v324 = vld [vmem:[%s164 + $0x208] sm:$0xff]
        %v325 = vld [vmem:[%s164 + $0x210] sm:$0xff]
        %v326 = vld [vmem:[%s164 + $0x218] sm:$0xf]
        %v327 = vld [vmem:[%s164 + $0x21c] sm:$0xff]
        %v328 = vld [vmem:[%s164 + $0x224] sm:$0xff]
        %v329 = vld [vmem:[%s164 + $0x22c] sm:$0xff]
        %v330 = vld [vmem:[%s164 + $0x234] sm:$0xff]
        %v331 = vld [vmem:[%s164 + $0x23c] sm:$0xf]
        %v332 = vld [vmem:[%s164 + $0x240] sm:$0xff]
        %v333 = vld [vmem:[%s164 + $0x248] sm:$0xff]
        %v334 = vld [vmem:[%s164 + $0x250] sm:$0xff]
        %v335 = vld [vmem:[%s164 + $0x258] sm:$0xff]
        %v336 = vld [vmem:[%s164 + $0x260] sm:$0xf]
        %v337 = vld [vmem:[%s164 + $0x264] sm:$0xff]
        %v338 = vld [vmem:[%s164 + $0x26c] sm:$0xff]
        %v339 = vld [vmem:[%s164 + $0x274] sm:$0xff]
        %v340 = vld [vmem:[%s164 + $0x27c] sm:$0xff]
        %v341 = vld [vmem:[%s164 + $0x284] sm:$0xf]
        %v342 = vld [vmem:[%s164 + $0x288] sm:$0xff]
        %v343 = vld [vmem:[%s164 + $0x290] sm:$0xff]
        %v344 = vld [vmem:[%s164 + $0x298] sm:$0xff]
        %v345 = vld [vmem:[%s164 + $0x2a0] sm:$0xff]
        %v346 = vld [vmem:[%s164 + $0x2a8] sm:$0xf]
        %v347 = vld [vmem:[%s164 + $0x2ac] sm:$0xff]
        %v348 = vld [vmem:[%s164 + $0x2b4] sm:$0xff]
        %v349 = vld [vmem:[%s164 + $0x2bc] sm:$0xff]
        %v350 = vld [vmem:[%s164 + $0x2c4] sm:$0xff]
        %v351 = vld [vmem:[%s164 + $0x2cc] sm:$0xf]
        %v352 = vld [vmem:[%s164 + $0x2d0] sm:$0xff]
        %v353 = vld [vmem:[%s164 + $0x2d8] sm:$0xff]
        %v354 = vld [vmem:[%s164 + $0x2e0] sm:$0xff]
        %v355 = vld [vmem:[%s164 + $0x2e8] sm:$0xff]
        %v356 = vld [vmem:[%s164 + $0x2f0] sm:$0xf]
        %v357 = vld [vmem:[%s164 + $0x2f4] sm:$0xff]
        %v358 = vld [vmem:[%s164 + $0x2fc] sm:$0xff]
        %v359 = vld [vmem:[%s164 + $0x304] sm:$0xff]
        %v360 = vld [vmem:[%s164 + $0x30c] sm:$0xff]
        %v361 = vld [vmem:[%s164 + $0x314] sm:$0xf]
        %v362 = vld [vmem:[%s164 + $0x318] sm:$0xff]
        %v363 = vld [vmem:[%s164 + $0x320] sm:$0xff]
        %v364 = vld [vmem:[%s164 + $0x328] sm:$0xff]
        %v365 = vld [vmem:[%s164 + $0x330] sm:$0xff]
        %v366 = vld [vmem:[%s164 + $0x338] sm:$0xf]
        %v367 = vld [vmem:[%s164 + $0x33c] sm:$0xff]
        %v368 = vld [vmem:[%s164 + $0x344] sm:$0xff]
        %v369 = vld [vmem:[%s164 + $0x34c] sm:$0xff]
        %v370 = vld [vmem:[%s164 + $0x354] sm:$0xff]
        %v371 = vld [vmem:[%s164 + $0x35c] sm:$0xf]
        %v372 = vld [vmem:[%s164 + $0x360] sm:$0xff]
        %v373 = vld [vmem:[%s164 + $0x368] sm:$0xff]
        %v374 = vld [vmem:[%s164 + $0x370] sm:$0xff]
        %v375 = vld [vmem:[%s164 + $0x378] sm:$0xff]
        %v376 = vld [vmem:[%s164 + $0x380] sm:$0xf]
        %v377 = vld [vmem:[%s164 + $0x384] sm:$0xff]
        %v378 = vld [vmem:[%s164 + $0x38c] sm:$0xff]
        %v379 = vld [vmem:[%s164 + $0x394] sm:$0xff]
        %v380 = vld [vmem:[%s164 + $0x39c] sm:$0xff]
        %v381 = vld [vmem:[%s164 + $0x3a4] sm:$0xf]
        %v382 = vld [vmem:[%s164 + $0x3a8] sm:$0xff]
        %v383 = vld [vmem:[%s164 + $0x3b0] sm:$0xff]
        %v384 = vld [vmem:[%s164 + $0x3b8] sm:$0xff]
        %v385 = vld [vmem:[%s164 + $0x3c0] sm:$0xff]
        %v386 = vld [vmem:[%s164 + $0x3c8] sm:$0xf]
        %v387 = vld [vmem:[%s164 + $0x3cc] sm:$0xff]
        %v388 = vld [vmem:[%s164 + $0x3d4] sm:$0xff]
        %v389 = vld [vmem:[%s164 + $0x3dc] sm:$0xff]
        %v390 = vld [vmem:[%s164 + $0x3e4] sm:$0xff]
        %v391 = vld [vmem:[%s164 + $0x3ec] sm:$0xf]
        %v392 = vld [vmem:[%s164 + $0x3f0] sm:$0xff]
        %v393 = vld [vmem:[%s164 + $0x3f8] sm:$0xff]
        %v394 = vld [vmem:[%s164 + $0x400] sm:$0xff]
        %v395 = vld [vmem:[%s164 + $0x408] sm:$0xff]
        %v396 = vld [vmem:[%s164 + $0x410] sm:$0xf]
        %v397 = vld [vmem:[%s164 + $0x414] sm:$0xff]
        %v398 = vld [vmem:[%s164 + $0x41c] sm:$0xff]
        %v399 = vld [vmem:[%s164 + $0x424] sm:$0xff]
        %v400 = vld [vmem:[%s164 + $0x42c] sm:$0xff]
        %v401 = vld [vmem:[%s164 + $0x434] sm:$0xf]
        %v402 = vld [vmem:[%s164 + $0x438] sm:$0xff]
        %v403 = vld [vmem:[%s164 + $0x440] sm:$0xff]
        %v404 = vld [vmem:[%s164 + $0x448] sm:$0xff]
        %v405 = vld [vmem:[%s164 + $0x450] sm:$0xff]
        %v406 = vld [vmem:[%s164 + $0x458] sm:$0xf]
        %v407 = vld [vmem:[%s164 + $0x45c] sm:$0xff]
        %v408 = vld [vmem:[%s164 + $0x464] sm:$0xff]
        %v409 = vld [vmem:[%s164 + $0x46c] sm:$0xff]
        %v410 = vld [vmem:[%s164 + $0x474] sm:$0xff]
        %v411 = vld [vmem:[%s164 + $0x47c] sm:$0xf]
        %v412 = vld [vmem:[%s164 + $0x480] sm:$0xff]
        %v413 = vld [vmem:[%s164 + $0x488] sm:$0xff]
        %v414 = vld [vmem:[%s164 + $0x490] sm:$0xff]
        %v415 = vld [vmem:[%s164 + $0x498] sm:$0xff]
        %v416 = vld [vmem:[%s164 + $0x4a0] sm:$0xf]
        %v417 = vld [vmem:[%s164 + $0x4a4] sm:$0xff]
        %v418 = vld [vmem:[%s164 + $0x4ac] sm:$0xff]
        %v419 = vld [vmem:[%s164 + $0x4b4] sm:$0xff]
        %v420 = vld [vmem:[%s164 + $0x4bc] sm:$0xff]
        %v421 = vld [vmem:[%s164 + $0x4c4] sm:$0xf]
        %v422 = vld [vmem:[%s164 + $0x4c8] sm:$0xff]
        %v423 = vld [vmem:[%s164 + $0x4d0] sm:$0xff]
        %v424 = vld [vmem:[%s164 + $0x4d8] sm:$0xff]
        %v425 = vld [vmem:[%s164 + $0x4e0] sm:$0xff]
        %v426 = vld [vmem:[%s164 + $0x4e8] sm:$0xf]
        %v427 = vld [vmem:[%s164 + $0x4ec] sm:$0xff]
        %v428 = vld [vmem:[%s164 + $0x4f4] sm:$0xff]
        %v429 = vld [vmem:[%s164 + $0x4fc] sm:$0xff]
        %v430 = vld [vmem:[%s164 + $0x504] sm:$0xff]
        %v431 = vld [vmem:[%s164 + $0x50c] sm:$0xf]
        %v432 = vld [vmem:[%s164 + $0x510] sm:$0xff]
        %v433 = vld [vmem:[%s164 + $0x518] sm:$0xff]
        %v434 = vld [vmem:[%s164 + $0x520] sm:$0xff]
        %v435 = vld [vmem:[%s164 + $0x528] sm:$0xff]
        %v436 = vld [vmem:[%s164 + $0x530] sm:$0xf]
        %v437 = vld [vmem:[%s164 + $0x534] sm:$0xff]
        %v438 = vld [vmem:[%s164 + $0x53c] sm:$0xff]
        %v439 = vld [vmem:[%s164 + $0x544] sm:$0xff]
        %v440 = vld [vmem:[%s164 + $0x54c] sm:$0xff]
        %v441 = vld [vmem:[%s164 + $0x554] sm:$0xf]
        %v442 = vld [vmem:[%s164 + $0x558] sm:$0xff]
        %v443 = vld [vmem:[%s164 + $0x560] sm:$0xff]
        %v444 = vld [vmem:[%s164 + $0x568] sm:$0xff]
        %v445 = vld [vmem:[%s164 + $0x570] sm:$0xff]
        %v446 = vld [vmem:[%s164 + $0x578] sm:$0xf]
        %v447 = vld [vmem:[%s164 + $0x57c] sm:$0xff]
        %v448 = vld [vmem:[%s164 + $0x584] sm:$0xff]
        %v449 = vld [vmem:[%s164 + $0x58c] sm:$0xff]
        %v450 = vld [vmem:[%s164 + $0x594] sm:$0xff]
        %v451 = vld [vmem:[%s164 + $0x59c] sm:$0xf]
        %v452 = vld [vmem:[%s164 + $0x5a0] sm:$0xff]
        %v453 = vld [vmem:[%s164 + $0x5a8] sm:$0xff]
        %v454 = vld [vmem:[%s164 + $0x5b0] sm:$0xff]
        %v455 = vld [vmem:[%s164 + $0x5b8] sm:$0xff]
        %v456 = vld [vmem:[%s164 + $0x5c0] sm:$0xf]
        %v457 = vld [vmem:[%s164 + $0x5c4] sm:$0xff]
        %v458 = vld [vmem:[%s164 + $0x5cc] sm:$0xff]
        %v459 = vld [vmem:[%s164 + $0x5d4] sm:$0xff]
        %v460 = vld [vmem:[%s164 + $0x5dc] sm:$0xff]
        %v461 = vld [vmem:[%s164 + $0x5e4] sm:$0xf]
        %v462 = vld [vmem:[%s164 + $0x5e8] sm:$0xff]
        %v463 = vld [vmem:[%s164 + $0x5f0] sm:$0xff]
        %v464 = vld [vmem:[%s164 + $0x5f8] sm:$0xff]
        %v465 = vld [vmem:[%s164 + $0x600] sm:$0xff]
        %v466 = vld [vmem:[%s164 + $0x608] sm:$0xf]
        %v467 = vld [vmem:[%s164 + $0x60c] sm:$0xff]
        %v468 = vld [vmem:[%s164 + $0x614] sm:$0xff]
        %v469 = vld [vmem:[%s164 + $0x61c] sm:$0xff]
        %v470 = vld [vmem:[%s164 + $0x624] sm:$0xff]
        %v471 = vld [vmem:[%s164 + $0x62c] sm:$0xf]
        %v472 = vld [vmem:[%s164 + $0x630] sm:$0xff]
        %v473 = vld [vmem:[%s164 + $0x638] sm:$0xff]
        %v474 = vld [vmem:[%s164 + $0x640] sm:$0xff]
        %v475 = vld [vmem:[%s164 + $0x648] sm:$0xff]
        %v476 = vld [vmem:[%s164 + $0x650] sm:$0xf]
        %v477 = vld [vmem:[%s164 + $0x654] sm:$0xff]
        %v478 = vld [vmem:[%s164 + $0x65c] sm:$0xff]
        %v479 = vld [vmem:[%s164 + $0x664] sm:$0xff]
        %v480 = vld [vmem:[%s164 + $0x66c] sm:$0xff]
        %v481 = vld [vmem:[%s164 + $0x674] sm:$0xf]
        %v482 = vld [vmem:[%s164 + $0x678] sm:$0xff]
        %v483 = vld [vmem:[%s164 + $0x680] sm:$0xff]
        %v484 = vld [vmem:[%s164 + $0x688] sm:$0xff]
        %v485 = vld [vmem:[%s164 + $0x690] sm:$0xff]
        %v486 = vld [vmem:[%s164 + $0x698] sm:$0xf]
        %v487 = vld [vmem:[%s164 + $0x69c] sm:$0xff]
        %v488 = vld [vmem:[%s164 + $0x6a4] sm:$0xff]
        %v489 = vld [vmem:[%s164 + $0x6ac] sm:$0xff]
        %v490 = vld [vmem:[%s164 + $0x6b4] sm:$0xff]
        %v491 = vld [vmem:[%s164 + $0x6bc] sm:$0xf]
        %v492 = vunpack.c.l.bf16 %v252
        %v493 = vunpack.c.h.bf16 %v252
        %v494 = vunpack.c.l.bf16 %v253
        %v495 = vunpack.c.h.bf16 %v253
        %v496 = vunpack.c.l.bf16 %v254
        %v497 = vunpack.c.h.bf16 %v254
        %v498 = vunpack.c.l.bf16 %v255
        %v499 = vunpack.c.h.bf16 %v255
        %v500 = vunpack.c.l.bf16 %v256
        %v501 = vunpack.c.l.bf16 %v257
        %v502 = vunpack.c.h.bf16 %v257
        %v503 = vunpack.c.l.bf16 %v258
        %v504 = vunpack.c.h.bf16 %v258
        %v505 = vunpack.c.l.bf16 %v259
        %v506 = vunpack.c.h.bf16 %v259
        %v507 = vunpack.c.l.bf16 %v260
        %v508 = vunpack.c.h.bf16 %v260
        %v509 = vunpack.c.l.bf16 %v261
        %v510 = vunpack.c.l.bf16 %v262
        %v511 = vunpack.c.h.bf16 %v262
        %v512 = vunpack.c.l.bf16 %v263
        %v513 = vunpack.c.h.bf16 %v263
        %v514 = vunpack.c.l.bf16 %v264
        %v515 = vunpack.c.h.bf16 %v264
        %v516 = vunpack.c.l.bf16 %v265
        %v517 = vunpack.c.h.bf16 %v265
        %v518 = vunpack.c.l.bf16 %v266
        %v519 = vunpack.c.l.bf16 %v267
        %v520 = vunpack.c.h.bf16 %v267
        %v521 = vunpack.c.l.bf16 %v268
        %v522 = vunpack.c.h.bf16 %v268
        %v523 = vunpack.c.l.bf16 %v269
        %v524 = vunpack.c.h.bf16 %v269
        %v525 = vunpack.c.l.bf16 %v270
        %v526 = vunpack.c.h.bf16 %v270
        %v527 = vunpack.c.l.bf16 %v271
        %v528 = vunpack.c.l.bf16 %v272
        %v529 = vunpack.c.h.bf16 %v272
        %v530 = vunpack.c.l.bf16 %v273
        %v531 = vunpack.c.h.bf16 %v273
        %v532 = vunpack.c.l.bf16 %v274
        %v533 = vunpack.c.h.bf16 %v274
        %v534 = vunpack.c.l.bf16 %v275
        %v535 = vunpack.c.h.bf16 %v275
        %v536 = vunpack.c.l.bf16 %v276
        %v537 = vunpack.c.l.bf16 %v277
        %v538 = vunpack.c.h.bf16 %v277
        %v539 = vunpack.c.l.bf16 %v278
        %v540 = vunpack.c.h.bf16 %v278
        %v541 = vunpack.c.l.bf16 %v279
        %v542 = vunpack.c.h.bf16 %v279
        %v543 = vunpack.c.l.bf16 %v280
        %v544 = vunpack.c.h.bf16 %v280
        %v545 = vunpack.c.l.bf16 %v281
        %v546 = vunpack.c.l.bf16 %v282
        %v547 = vunpack.c.h.bf16 %v282
        %v548 = vunpack.c.l.bf16 %v283
        %v549 = vunpack.c.h.bf16 %v283
        %v550 = vunpack.c.l.bf16 %v284
        %v551 = vunpack.c.h.bf16 %v284
        %v552 = vunpack.c.l.bf16 %v285
        %v553 = vunpack.c.h.bf16 %v285
        %v554 = vunpack.c.l.bf16 %v286
        %v555 = vunpack.c.l.bf16 %v287
        %v556 = vunpack.c.h.bf16 %v287
        %v557 = vunpack.c.l.bf16 %v288
        %v558 = vunpack.c.h.bf16 %v288
        %v559 = vunpack.c.l.bf16 %v289
        %v560 = vunpack.c.h.bf16 %v289
        %v561 = vunpack.c.l.bf16 %v290
        %v562 = vunpack.c.h.bf16 %v290
        %v563 = vunpack.c.l.bf16 %v291
        %v564 = vunpack.c.l.bf16 %v292
        %v565 = vunpack.c.h.bf16 %v292
        %v566 = vunpack.c.l.bf16 %v293
        %v567 = vunpack.c.h.bf16 %v293
        %v568 = vunpack.c.l.bf16 %v294
        %v569 = vunpack.c.h.bf16 %v294
        %v570 = vunpack.c.l.bf16 %v295
        %v571 = vunpack.c.h.bf16 %v295
        %v572 = vunpack.c.l.bf16 %v296
        %v573 = vunpack.c.l.bf16 %v297
        %v574 = vunpack.c.h.bf16 %v297
        %v575 = vunpack.c.l.bf16 %v298
        %v576 = vunpack.c.h.bf16 %v298
        %v577 = vunpack.c.l.bf16 %v299
        %v578 = vunpack.c.h.bf16 %v299
        %v579 = vunpack.c.l.bf16 %v300
        %v580 = vunpack.c.h.bf16 %v300
        %v581 = vunpack.c.l.bf16 %v301
        %v582 = vunpack.c.l.bf16 %v302
        %v583 = vunpack.c.h.bf16 %v302
        %v584 = vunpack.c.l.bf16 %v303
        %v585 = vunpack.c.h.bf16 %v303
        %v586 = vunpack.c.l.bf16 %v304
        %v587 = vunpack.c.h.bf16 %v304
        %v588 = vunpack.c.l.bf16 %v305
        %v589 = vunpack.c.h.bf16 %v305
        %v590 = vunpack.c.l.bf16 %v306
        %v591 = vunpack.c.l.bf16 %v307
        %v592 = vunpack.c.h.bf16 %v307
        %v593 = vunpack.c.l.bf16 %v308
        %v594 = vunpack.c.h.bf16 %v308
        %v595 = vunpack.c.l.bf16 %v309
        %v596 = vunpack.c.h.bf16 %v309
        %v597 = vunpack.c.l.bf16 %v310
        %v598 = vunpack.c.h.bf16 %v310
        %v599 = vunpack.c.l.bf16 %v311
        %v600 = vunpack.c.l.bf16 %v312
        %v601 = vunpack.c.h.bf16 %v312
        %v602 = vunpack.c.l.bf16 %v313
        %v603 = vunpack.c.h.bf16 %v313
        %v604 = vunpack.c.l.bf16 %v314
        %v605 = vunpack.c.h.bf16 %v314
        %v606 = vunpack.c.l.bf16 %v315
        %v607 = vunpack.c.h.bf16 %v315
        %v608 = vunpack.c.l.bf16 %v316
        %v609 = vunpack.c.l.bf16 %v317
        %v610 = vunpack.c.h.bf16 %v317
        %v611 = vunpack.c.l.bf16 %v318
        %v612 = vunpack.c.h.bf16 %v318
        %v613 = vunpack.c.l.bf16 %v319
        %v614 = vunpack.c.h.bf16 %v319
        %v615 = vunpack.c.l.bf16 %v320
        %v616 = vunpack.c.h.bf16 %v320
        %v617 = vunpack.c.l.bf16 %v321
        %v618 = vunpack.c.l.bf16 %v322
        %v619 = vunpack.c.h.bf16 %v322
        %v620 = vunpack.c.l.bf16 %v323
        %v621 = vunpack.c.h.bf16 %v323
        %v622 = vunpack.c.l.bf16 %v324
        %v623 = vunpack.c.h.bf16 %v324
        %v624 = vunpack.c.l.bf16 %v325
        %v625 = vunpack.c.h.bf16 %v325
        %v626 = vunpack.c.l.bf16 %v326
        %v627 = vunpack.c.l.bf16 %v327
        %v628 = vunpack.c.h.bf16 %v327
        %v629 = vunpack.c.l.bf16 %v328
        %v630 = vunpack.c.h.bf16 %v328
        %v631 = vunpack.c.l.bf16 %v329
        %v632 = vunpack.c.h.bf16 %v329
        %v633 = vunpack.c.l.bf16 %v330
        %v634 = vunpack.c.h.bf16 %v330
        %v635 = vunpack.c.l.bf16 %v331
        %v636 = vunpack.c.l.bf16 %v332
        %v637 = vunpack.c.h.bf16 %v332
        %v638 = vunpack.c.l.bf16 %v333
        %v639 = vunpack.c.h.bf16 %v333
        %v640 = vunpack.c.l.bf16 %v334
        %v641 = vunpack.c.h.bf16 %v334
        %v642 = vunpack.c.l.bf16 %v335
        %v643 = vunpack.c.h.bf16 %v335
        %v644 = vunpack.c.l.bf16 %v336
        %v645 = vunpack.c.l.bf16 %v337
        %v646 = vunpack.c.h.bf16 %v337
        %v647 = vunpack.c.l.bf16 %v338
        %v648 = vunpack.c.h.bf16 %v338
        %v649 = vunpack.c.l.bf16 %v339
        %v650 = vunpack.c.h.bf16 %v339
        %v651 = vunpack.c.l.bf16 %v340
        %v652 = vunpack.c.h.bf16 %v340
        %v653 = vunpack.c.l.bf16 %v341
        %v654 = vunpack.c.l.bf16 %v342
        %v655 = vunpack.c.h.bf16 %v342
        %v656 = vunpack.c.l.bf16 %v343
        %v657 = vunpack.c.h.bf16 %v343
        %v658 = vunpack.c.l.bf16 %v344
        %v659 = vunpack.c.h.bf16 %v344
        %v660 = vunpack.c.l.bf16 %v345
        %v661 = vunpack.c.h.bf16 %v345
        %v662 = vunpack.c.l.bf16 %v346
        %v663 = vunpack.c.l.bf16 %v347
        %v664 = vunpack.c.h.bf16 %v347
        %v665 = vunpack.c.l.bf16 %v348
        %v666 = vunpack.c.h.bf16 %v348
        %v667 = vunpack.c.l.bf16 %v349
        %v668 = vunpack.c.h.bf16 %v349
        %v669 = vunpack.c.l.bf16 %v350
        %v670 = vunpack.c.h.bf16 %v350
        %v671 = vunpack.c.l.bf16 %v351
        %v672 = vunpack.c.l.bf16 %v352
        %v673 = vunpack.c.h.bf16 %v352
        %v674 = vunpack.c.l.bf16 %v353
        %v675 = vunpack.c.h.bf16 %v353
        %v676 = vunpack.c.l.bf16 %v354
        %v677 = vunpack.c.h.bf16 %v354
        %v678 = vunpack.c.l.bf16 %v355
        %v679 = vunpack.c.h.bf16 %v355
        %v680 = vunpack.c.l.bf16 %v356
        %v681 = vunpack.c.l.bf16 %v357
        %v682 = vunpack.c.h.bf16 %v357
        %v683 = vunpack.c.l.bf16 %v358
        %v684 = vunpack.c.h.bf16 %v358
        %v685 = vunpack.c.l.bf16 %v359
        %v686 = vunpack.c.h.bf16 %v359
        %v687 = vunpack.c.l.bf16 %v360
        %v688 = vunpack.c.h.bf16 %v360
        %v689 = vunpack.c.l.bf16 %v361
        %v690 = vunpack.c.l.bf16 %v362
        %v691 = vunpack.c.h.bf16 %v362
        %v692 = vunpack.c.l.bf16 %v363
        %v693 = vunpack.c.h.bf16 %v363
        %v694 = vunpack.c.l.bf16 %v364
        %v695 = vunpack.c.h.bf16 %v364
        %v696 = vunpack.c.l.bf16 %v365
        %v697 = vunpack.c.h.bf16 %v365
        %v698 = vunpack.c.l.bf16 %v366
        %v699 = vunpack.c.l.bf16 %v367
        %v700 = vunpack.c.h.bf16 %v367
        %v701 = vunpack.c.l.bf16 %v368
        %v702 = vunpack.c.h.bf16 %v368
        %v703 = vunpack.c.l.bf16 %v369
        %v704 = vunpack.c.h.bf16 %v369
        %v705 = vunpack.c.l.bf16 %v370
        %v706 = vunpack.c.h.bf16 %v370
        %v707 = vunpack.c.l.bf16 %v371
        %v708 = vunpack.c.l.bf16 %v372
        %v709 = vunpack.c.h.bf16 %v372
        %v710 = vunpack.c.l.bf16 %v373
        %v711 = vunpack.c.h.bf16 %v373
        %v712 = vunpack.c.l.bf16 %v374
        %v713 = vunpack.c.h.bf16 %v374
        %v714 = vunpack.c.l.bf16 %v375
        %v715 = vunpack.c.h.bf16 %v375
        %v716 = vunpack.c.l.bf16 %v376
        %v717 = vunpack.c.l.bf16 %v377
        %v718 = vunpack.c.h.bf16 %v377
        %v719 = vunpack.c.l.bf16 %v378
        %v720 = vunpack.c.h.bf16 %v378
        %v721 = vunpack.c.l.bf16 %v379
        %v722 = vunpack.c.h.bf16 %v379
        %v723 = vunpack.c.l.bf16 %v380
        %v724 = vunpack.c.h.bf16 %v380
        %v725 = vunpack.c.l.bf16 %v381
        %v726 = vunpack.c.l.bf16 %v382
        %v727 = vunpack.c.h.bf16 %v382
        %v728 = vunpack.c.l.bf16 %v383
        %v729 = vunpack.c.h.bf16 %v383
        %v730 = vunpack.c.l.bf16 %v384
        %v731 = vunpack.c.h.bf16 %v384
        %v732 = vunpack.c.l.bf16 %v385
        %v733 = vunpack.c.h.bf16 %v385
        %v734 = vunpack.c.l.bf16 %v386
        %v735 = vunpack.c.l.bf16 %v387
        %v736 = vunpack.c.h.bf16 %v387
        %v737 = vunpack.c.l.bf16 %v388
        %v738 = vunpack.c.h.bf16 %v388
        %v739 = vunpack.c.l.bf16 %v389
        %v740 = vunpack.c.h.bf16 %v389
        %v741 = vunpack.c.l.bf16 %v390
        %v742 = vunpack.c.h.bf16 %v390
        %v743 = vunpack.c.l.bf16 %v391
        %v744 = vunpack.c.l.bf16 %v392
        %v745 = vunpack.c.h.bf16 %v392
        %v746 = vunpack.c.l.bf16 %v393
        %v747 = vunpack.c.h.bf16 %v393
        %v748 = vunpack.c.l.bf16 %v394
        %v749 = vunpack.c.h.bf16 %v394
        %v750 = vunpack.c.l.bf16 %v395
        %v751 = vunpack.c.h.bf16 %v395
        %v752 = vunpack.c.l.bf16 %v396
        %v753 = vunpack.c.l.bf16 %v397
        %v754 = vunpack.c.h.bf16 %v397
        %v755 = vunpack.c.l.bf16 %v398
        %v756 = vunpack.c.h.bf16 %v398
        %v757 = vunpack.c.l.bf16 %v399
        %v758 = vunpack.c.h.bf16 %v399
        %v759 = vunpack.c.l.bf16 %v400
        %v760 = vunpack.c.h.bf16 %v400
        %v761 = vunpack.c.l.bf16 %v401
        %v762 = vunpack.c.l.bf16 %v402
        %v763 = vunpack.c.h.bf16 %v402
        %v764 = vunpack.c.l.bf16 %v403
        %v765 = vunpack.c.h.bf16 %v403
        %v766 = vunpack.c.l.bf16 %v404
        %v767 = vunpack.c.h.bf16 %v404
        %v768 = vunpack.c.l.bf16 %v405
        %v769 = vunpack.c.h.bf16 %v405
        %v770 = vunpack.c.l.bf16 %v406
        %v771 = vunpack.c.l.bf16 %v407
        %v772 = vunpack.c.h.bf16 %v407
        %v773 = vunpack.c.l.bf16 %v408
        %v774 = vunpack.c.h.bf16 %v408
        %v775 = vunpack.c.l.bf16 %v409
        %v776 = vunpack.c.h.bf16 %v409
        %v777 = vunpack.c.l.bf16 %v410
        %v778 = vunpack.c.h.bf16 %v410
        %v779 = vunpack.c.l.bf16 %v411
        %v780 = vunpack.c.l.bf16 %v412
        %v781 = vunpack.c.h.bf16 %v412
        %v782 = vunpack.c.l.bf16 %v413
        %v783 = vunpack.c.h.bf16 %v413
        %v784 = vunpack.c.l.bf16 %v414
        %v785 = vunpack.c.h.bf16 %v414
        %v786 = vunpack.c.l.bf16 %v415
        %v787 = vunpack.c.h.bf16 %v415
        %v788 = vunpack.c.l.bf16 %v416
        %v789 = vunpack.c.l.bf16 %v417
        %v790 = vunpack.c.h.bf16 %v417
        %v791 = vunpack.c.l.bf16 %v418
        %v792 = vunpack.c.h.bf16 %v418
        %v793 = vunpack.c.l.bf16 %v419
        %v794 = vunpack.c.h.bf16 %v419
        %v795 = vunpack.c.l.bf16 %v420
        %v796 = vunpack.c.h.bf16 %v420
        %v797 = vunpack.c.l.bf16 %v421
        %v798 = vunpack.c.l.bf16 %v422
        %v799 = vunpack.c.h.bf16 %v422
        %v800 = vunpack.c.l.bf16 %v423
        %v801 = vunpack.c.h.bf16 %v423
        %v802 = vunpack.c.l.bf16 %v424
        %v803 = vunpack.c.h.bf16 %v424
        %v804 = vunpack.c.l.bf16 %v425
        %v805 = vunpack.c.h.bf16 %v425
        %v806 = vunpack.c.l.bf16 %v426
        %v807 = vunpack.c.l.bf16 %v427
        %v808 = vunpack.c.h.bf16 %v427
        %v809 = vunpack.c.l.bf16 %v428
        %v810 = vunpack.c.h.bf16 %v428
        %v811 = vunpack.c.l.bf16 %v429
        %v812 = vunpack.c.h.bf16 %v429
        %v813 = vunpack.c.l.bf16 %v430
        %v814 = vunpack.c.h.bf16 %v430
        %v815 = vunpack.c.l.bf16 %v431
        %v816 = vunpack.c.l.bf16 %v432
        %v817 = vunpack.c.h.bf16 %v432
        %v818 = vunpack.c.l.bf16 %v433
        %v819 = vunpack.c.h.bf16 %v433
        %v820 = vunpack.c.l.bf16 %v434
        %v821 = vunpack.c.h.bf16 %v434
        %v822 = vunpack.c.l.bf16 %v435
        %v823 = vunpack.c.h.bf16 %v435
        %v824 = vunpack.c.l.bf16 %v436
        %v825 = vunpack.c.l.bf16 %v437
        %v826 = vunpack.c.h.bf16 %v437
        %v827 = vunpack.c.l.bf16 %v438
        %v828 = vunpack.c.h.bf16 %v438
        %v829 = vunpack.c.l.bf16 %v439
        %v830 = vunpack.c.h.bf16 %v439
        %v831 = vunpack.c.l.bf16 %v440
        %v832 = vunpack.c.h.bf16 %v440
        %v833 = vunpack.c.l.bf16 %v441
        %v834 = vunpack.c.l.bf16 %v442
        %v835 = vunpack.c.h.bf16 %v442
        %v836 = vunpack.c.l.bf16 %v443
        %v837 = vunpack.c.h.bf16 %v443
        %v838 = vunpack.c.l.bf16 %v444
        %v839 = vunpack.c.h.bf16 %v444
        %v840 = vunpack.c.l.bf16 %v445
        %v841 = vunpack.c.h.bf16 %v445
        %v842 = vunpack.c.l.bf16 %v446
        %v843 = vunpack.c.l.bf16 %v447
        %v844 = vunpack.c.h.bf16 %v447
        %v845 = vunpack.c.l.bf16 %v448
        %v846 = vunpack.c.h.bf16 %v448
        %v847 = vunpack.c.l.bf16 %v449
        %v848 = vunpack.c.h.bf16 %v449
        %v849 = vunpack.c.l.bf16 %v450
        %v850 = vunpack.c.h.bf16 %v450
        %v851 = vunpack.c.l.bf16 %v451
        %v852 = vunpack.c.l.bf16 %v452
        %v853 = vunpack.c.h.bf16 %v452
        %v854 = vunpack.c.l.bf16 %v453
        %v855 = vunpack.c.h.bf16 %v453
        %v856 = vunpack.c.l.bf16 %v454
        %v857 = vunpack.c.h.bf16 %v454
        %v858 = vunpack.c.l.bf16 %v455
        %v859 = vunpack.c.h.bf16 %v455
        %v860 = vunpack.c.l.bf16 %v456
        %v861 = vunpack.c.l.bf16 %v457
        %v862 = vunpack.c.h.bf16 %v457
        %v863 = vunpack.c.l.bf16 %v458
        %v864 = vunpack.c.h.bf16 %v458
        %v865 = vunpack.c.l.bf16 %v459
        %v866 = vunpack.c.h.bf16 %v459
        %v867 = vunpack.c.l.bf16 %v460
        %v868 = vunpack.c.h.bf16 %v460
        %v869 = vunpack.c.l.bf16 %v461
        %v870 = vunpack.c.l.bf16 %v462
        %v871 = vunpack.c.h.bf16 %v462
        %v872 = vunpack.c.l.bf16 %v463
        %v873 = vunpack.c.h.bf16 %v463
        %v874 = vunpack.c.l.bf16 %v464
        %v875 = vunpack.c.h.bf16 %v464
        %v876 = vunpack.c.l.bf16 %v465
        %v877 = vunpack.c.h.bf16 %v465
        %v878 = vunpack.c.l.bf16 %v466
        %v879 = vunpack.c.l.bf16 %v467
        %v880 = vunpack.c.h.bf16 %v467
        %v881 = vunpack.c.l.bf16 %v468
        %v882 = vunpack.c.h.bf16 %v468
        %v883 = vunpack.c.l.bf16 %v469
        %v884 = vunpack.c.h.bf16 %v469
        %v885 = vunpack.c.l.bf16 %v470
        %v886 = vunpack.c.h.bf16 %v470
        %v887 = vunpack.c.l.bf16 %v471
        %v888 = vunpack.c.l.bf16 %v472
        %v889 = vunpack.c.h.bf16 %v472
        %v890 = vunpack.c.l.bf16 %v473
        %v891 = vunpack.c.h.bf16 %v473
        %v892 = vunpack.c.l.bf16 %v474
        %v893 = vunpack.c.h.bf16 %v474
        %v894 = vunpack.c.l.bf16 %v475
        %v895 = vunpack.c.h.bf16 %v475
        %v896 = vunpack.c.l.bf16 %v476
        %v897 = vunpack.c.l.bf16 %v477
        %v898 = vunpack.c.h.bf16 %v477
        %v899 = vunpack.c.l.bf16 %v478
        %v900 = vunpack.c.h.bf16 %v478
        %v901 = vunpack.c.l.bf16 %v479
        %v902 = vunpack.c.h.bf16 %v479
        %v903 = vunpack.c.l.bf16 %v480
        %v904 = vunpack.c.h.bf16 %v480
        %v905 = vunpack.c.l.bf16 %v481
        %v906 = vunpack.c.l.bf16 %v482
        %v907 = vunpack.c.h.bf16 %v482
        %v908 = vunpack.c.l.bf16 %v483
        %v909 = vunpack.c.h.bf16 %v483
        %v910 = vunpack.c.l.bf16 %v484
        %v911 = vunpack.c.h.bf16 %v484
        %v912 = vunpack.c.l.bf16 %v485
        %v913 = vunpack.c.h.bf16 %v485
        %v914 = vunpack.c.l.bf16 %v486
        %v915 = vunpack.c.l.bf16 %v487
        %v916 = vunpack.c.h.bf16 %v487
        %v917 = vunpack.c.l.bf16 %v488
        %v918 = vunpack.c.h.bf16 %v488
        %v919 = vunpack.c.l.bf16 %v489
        %v920 = vunpack.c.h.bf16 %v489
        %v921 = vunpack.c.l.bf16 %v490
        %v922 = vunpack.c.h.bf16 %v490
        %v923 = vunpack.c.l.bf16 %v491
        %924 = vmatpush.msra.mxu0 %v627
        %925 = vmatpush.msra.mxu0 %v618
        %926 = vmatpush.msra.mxu0 %v609
        %927 = vmatpush.msra.mxu0 %v600
        %928 = vmatpush.msra.mxu0 %v591
        %929 = vmatpush.msra.mxu0 %v582
        %930 = vmatpush.msra.mxu0 %v573
        %931 = vmatpush.msra.mxu0 %v564
        %932 = vmatpush.msra.mxu0 %v555
        %933 = vmatpush.msra.mxu0 %v546
        %934 = vmatpush.msra.mxu0 %v537
        %935 = vmatpush.msra.mxu0 %v528
        %936 = vmatpush.msra.mxu0 %v519
        %937 = vmatpush.msra.mxu0 %v510
        %938 = vmatpush.msra.mxu0 %v501
        %939 = vmatpush.msra.mxu0 %v492
        %940 = vmatmul.f32.gmra.mxu0 %v231
        %v941 = vpop.f32.mrf.mxu0
        %v942 = vadd.f32 0.0, %v941
        %943 = vmatmul.f32.gmra.mxu0 %v234
        %v944 = vpop.f32.mrf.mxu0
        %v945 = vadd.f32 0.0, %v944
        %946 = vmatmul.f32.gmra.mxu0 %v237
        %v947 = vpop.f32.mrf.mxu0
        %v948 = vadd.f32 0.0, %v947
        %949 = vmatmul.f32.gmra.mxu0 %v240
        %v950 = vpop.f32.mrf.mxu0
        %v951 = vadd.f32 0.0, %v950
        %952 = vmatmul.f32.gmra.mxu0 %v243
        %v953 = vpop.f32.mrf.mxu0
        %v954 = vadd.f32 0.0, %v953
        %955 = vmatmul.f32.gmra.mxu0 %v246
        %v956 = vpop.f32.mrf.mxu0
        %v957 = vadd.f32 0.0, %v956
        %958 = vmatmul.f32.gmra.mxu0 %v249
        %v959 = vpop.f32.mrf.mxu0
        %v960 = vadd.f32 0.0, %v959
        %961 = vdwg.mxu0
        %962 = vmatpush.msra.mxu0 %v771
        %963 = vmatpush.msra.mxu0 %v762
        %964 = vmatpush.msra.mxu0 %v753
        %965 = vmatpush.msra.mxu0 %v744
        %966 = vmatpush.msra.mxu0 %v735
        %967 = vmatpush.msra.mxu0 %v726
        %968 = vmatpush.msra.mxu0 %v717
        %969 = vmatpush.msra.mxu0 %v708
        %970 = vmatpush.msra.mxu0 %v699
        %971 = vmatpush.msra.mxu0 %v690
        %972 = vmatpush.msra.mxu0 %v681
        %973 = vmatpush.msra.mxu0 %v672
        %974 = vmatpush.msra.mxu0 %v663
        %975 = vmatpush.msra.mxu0 %v654
        %976 = vmatpush.msra.mxu0 %v645
        %977 = vmatpush.msra.mxu0 %v636
        %978 = vmatmul.f32.gmra.mxu0 %v232
        %v979 = vpop.f32.mrf.mxu0
        %v980 = vadd.f32 %v942, %v979
        %981 = vmatmul.f32.gmra.mxu0 %v235
        %v982 = vpop.f32.mrf.mxu0
        %v983 = vadd.f32 %v945, %v982
        %984 = vmatmul.f32.gmra.mxu0 %v238
        %v985 = vpop.f32.mrf.mxu0
        %v986 = vadd.f32 %v948, %v985
        %987 = vmatmul.f32.gmra.mxu0 %v241
        %v988 = vpop.f32.mrf.mxu0
        %v989 = vadd.f32 %v951, %v988
        %990 = vmatmul.f32.gmra.mxu0 %v244
        %v991 = vpop.f32.mrf.mxu0
        %v992 = vadd.f32 %v954, %v991
        %993 = vmatmul.f32.gmra.mxu0 %v247
        %v994 = vpop.f32.mrf.mxu0
        %v995 = vadd.f32 %v957, %v994
        %996 = vmatmul.f32.gmra.mxu0 %v250
        %v997 = vpop.f32.mrf.mxu0
        %v998 = vadd.f32 %v960, %v997
        %999 = vdwg.mxu0
        %1000 = vmatpush.msra.mxu0 %v915
        %1001 = vmatpush.msra.mxu0 %v906
        %1002 = vmatpush.msra.mxu0 %v897
        %1003 = vmatpush.msra.mxu0 %v888
        %1004 = vmatpush.msra.mxu0 %v879
        %1005 = vmatpush.msra.mxu0 %v870
        %1006 = vmatpush.msra.mxu0 %v861
        %1007 = vmatpush.msra.mxu0 %v852
        %1008 = vmatpush.msra.mxu0 %v843
        %1009 = vmatpush.msra.mxu0 %v834
        %1010 = vmatpush.msra.mxu0 %v825
        %1011 = vmatpush.msra.mxu0 %v816
        %1012 = vmatpush.msra.mxu0 %v807
        %1013 = vmatpush.msra.mxu0 %v798
        %1014 = vmatpush.msra.mxu0 %v789
        %1015 = vmatpush.msra.mxu0 %v780
        %1016 = vmatmul.f32.gmra.mxu0 %v233
        %v1017 = vpop.f32.mrf.mxu0
        %v1018 = vadd.f32 %v980, %v1017
        %1019 = vmatmul.f32.gmra.mxu0 %v236
        %v1020 = vpop.f32.mrf.mxu0
        %v1021 = vadd.f32 %v983, %v1020
        %1022 = vmatmul.f32.gmra.mxu0 %v239
        %v1023 = vpop.f32.mrf.mxu0
        %v1024 = vadd.f32 %v986, %v1023
        %1025 = vmatmul.f32.gmra.mxu0 %v242
        %v1026 = vpop.f32.mrf.mxu0
        %v1027 = vadd.f32 %v989, %v1026
        %1028 = vmatmul.f32.gmra.mxu0 %v245
        %v1029 = vpop.f32.mrf.mxu0
        %v1030 = vadd.f32 %v992, %v1029
        %1031 = vmatmul.f32.gmra.mxu0 %v248
        %v1032 = vpop.f32.mrf.mxu0
        %v1033 = vadd.f32 %v995, %v1032
        %1034 = vmatmul.f32.gmra.mxu0 %v251
        %v1035 = vpop.f32.mrf.mxu0
        %v1036 = vadd.f32 %v998, %v1035
        %1037 = vdwg.mxu0
        %1038 = vmatpush.msra.mxu0 %v628
        %1039 = vmatpush.msra.mxu0 %v619
        %1040 = vmatpush.msra.mxu0 %v610
        %1041 = vmatpush.msra.mxu0 %v601
        %1042 = vmatpush.msra.mxu0 %v592
        %1043 = vmatpush.msra.mxu0 %v583
        %1044 = vmatpush.msra.mxu0 %v574
        %1045 = vmatpush.msra.mxu0 %v565
        %1046 = vmatpush.msra.mxu0 %v556
        %1047 = vmatpush.msra.mxu0 %v547
        %1048 = vmatpush.msra.mxu0 %v538
        %1049 = vmatpush.msra.mxu0 %v529
        %1050 = vmatpush.msra.mxu0 %v520
        %1051 = vmatpush.msra.mxu0 %v511
        %1052 = vmatpush.msra.mxu0 %v502
        %1053 = vmatpush.msra.mxu0 %v493
        %1054 = vmatmul.f32.gmra.mxu0 %v231
        %v1055 = vpop.f32.mrf.mxu0
        %v1056 = vadd.f32 0.0, %v1055
        %1057 = vmatmul.f32.gmra.mxu0 %v234
        %v1058 = vpop.f32.mrf.mxu0
        %v1059 = vadd.f32 0.0, %v1058
        %1060 = vmatmul.f32.gmra.mxu0 %v237
        %v1061 = vpop.f32.mrf.mxu0
        %v1062 = vadd.f32 0.0, %v1061
        %1063 = vmatmul.f32.gmra.mxu0 %v240
        %v1064 = vpop.f32.mrf.mxu0
        %v1065 = vadd.f32 0.0, %v1064
        %1066 = vmatmul.f32.gmra.mxu0 %v243
        %v1067 = vpop.f32.mrf.mxu0
        %v1068 = vadd.f32 0.0, %v1067
        %1069 = vmatmul.f32.gmra.mxu0 %v246
        %v1070 = vpop.f32.mrf.mxu0
        %v1071 = vadd.f32 0.0, %v1070
        %1072 = vmatmul.f32.gmra.mxu0 %v249
        %v1073 = vpop.f32.mrf.mxu0
        %v1074 = vadd.f32 0.0, %v1073
        %1075 = vdwg.mxu0
        %1076 = vmatpush.msra.mxu0 %v772
        %1077 = vmatpush.msra.mxu0 %v763
        %1078 = vmatpush.msra.mxu0 %v754
        %1079 = vmatpush.msra.mxu0 %v745
        %1080 = vmatpush.msra.mxu0 %v736
        %1081 = vmatpush.msra.mxu0 %v727
        %1082 = vmatpush.msra.mxu0 %v718
        %1083 = vmatpush.msra.mxu0 %v709
        %1084 = vmatpush.msra.mxu0 %v700
        %1085 = vmatpush.msra.mxu0 %v691
        %1086 = vmatpush.msra.mxu0 %v682
        %1087 = vmatpush.msra.mxu0 %v673
        %1088 = vmatpush.msra.mxu0 %v664
        %1089 = vmatpush.msra.mxu0 %v655
        %1090 = vmatpush.msra.mxu0 %v646
        %1091 = vmatpush.msra.mxu0 %v637
        %1092 = vmatmul.f32.gmra.mxu0 %v232
        %v1093 = vpop.f32.mrf.mxu0
        %v1094 = vadd.f32 %v1056, %v1093
        %1095 = vmatmul.f32.gmra.mxu0 %v235
        %v1096 = vpop.f32.mrf.mxu0
        %v1097 = vadd.f32 %v1059, %v1096
        %1098 = vmatmul.f32.gmra.mxu0 %v238
        %v1099 = vpop.f32.mrf.mxu0
        %v1100 = vadd.f32 %v1062, %v1099
        %1101 = vmatmul.f32.gmra.mxu0 %v241
        %v1102 = vpop.f32.mrf.mxu0
        %v1103 = vadd.f32 %v1065, %v1102
        %1104 = vmatmul.f32.gmra.mxu0 %v244
        %v1105 = vpop.f32.mrf.mxu0
        %v1106 = vadd.f32 %v1068, %v1105
        %1107 = vmatmul.f32.gmra.mxu0 %v247
        %v1108 = vpop.f32.mrf.mxu0
        %v1109 = vadd.f32 %v1071, %v1108
        %1110 = vmatmul.f32.gmra.mxu0 %v250
        %v1111 = vpop.f32.mrf.mxu0
        %v1112 = vadd.f32 %v1074, %v1111
        %1113 = vdwg.mxu0
        %1114 = vmatpush.msra.mxu0 %v916
        %1115 = vmatpush.msra.mxu0 %v907
        %1116 = vmatpush.msra.mxu0 %v898
        %1117 = vmatpush.msra.mxu0 %v889
        %1118 = vmatpush.msra.mxu0 %v880
        %1119 = vmatpush.msra.mxu0 %v871
        %1120 = vmatpush.msra.mxu0 %v862
        %1121 = vmatpush.msra.mxu0 %v853
        %1122 = vmatpush.msra.mxu0 %v844
        %1123 = vmatpush.msra.mxu0 %v835
        %1124 = vmatpush.msra.mxu0 %v826
        %1125 = vmatpush.msra.mxu0 %v817
        %1126 = vmatpush.msra.mxu0 %v808
        %1127 = vmatpush.msra.mxu0 %v799
        %1128 = vmatpush.msra.mxu0 %v790
        %1129 = vmatpush.msra.mxu0 %v781
        %1130 = vmatmul.f32.gmra.mxu0 %v233
        %v1131 = vpop.f32.mrf.mxu0
        %v1132 = vadd.f32 %v1094, %v1131
        %1133 = vmatmul.f32.gmra.mxu0 %v236
        %v1134 = vpop.f32.mrf.mxu0
        %v1135 = vadd.f32 %v1097, %v1134
        %1136 = vmatmul.f32.gmra.mxu0 %v239
        %v1137 = vpop.f32.mrf.mxu0
        %v1138 = vadd.f32 %v1100, %v1137
        %1139 = vmatmul.f32.gmra.mxu0 %v242
        %v1140 = vpop.f32.mrf.mxu0
        %v1141 = vadd.f32 %v1103, %v1140
        %1142 = vmatmul.f32.gmra.mxu0 %v245
        %v1143 = vpop.f32.mrf.mxu0
        %v1144 = vadd.f32 %v1106, %v1143
        %1145 = vmatmul.f32.gmra.mxu0 %v248
        %v1146 = vpop.f32.mrf.mxu0
        %v1147 = vadd.f32 %v1109, %v1146
        %1148 = vmatmul.f32.gmra.mxu0 %v251
        %v1149 = vpop.f32.mrf.mxu0
        %v1150 = vadd.f32 %v1112, %v1149
        %1151 = vdwg.mxu0
        %1152 = vmatpush.msra.mxu0 %v629
        %1153 = vmatpush.msra.mxu0 %v620
        %1154 = vmatpush.msra.mxu0 %v611
        %1155 = vmatpush.msra.mxu0 %v602
        %1156 = vmatpush.msra.mxu0 %v593
        %1157 = vmatpush.msra.mxu0 %v584
        %1158 = vmatpush.msra.mxu0 %v575
        %1159 = vmatpush.msra.mxu0 %v566
        %1160 = vmatpush.msra.mxu0 %v557
        %1161 = vmatpush.msra.mxu0 %v548
        %1162 = vmatpush.msra.mxu0 %v539
        %1163 = vmatpush.msra.mxu0 %v530
        %1164 = vmatpush.msra.mxu0 %v521
        %1165 = vmatpush.msra.mxu0 %v512
        %1166 = vmatpush.msra.mxu0 %v503
        %1167 = vmatpush.msra.mxu0 %v494
        %1168 = vmatmul.f32.gmra.mxu0 %v231
        %v1169 = vpop.f32.mrf.mxu0
        %v1170 = vadd.f32 0.0, %v1169
        %1171 = vmatmul.f32.gmra.mxu0 %v234
        %v1172 = vpop.f32.mrf.mxu0
        %v1173 = vadd.f32 0.0, %v1172
        %1174 = vmatmul.f32.gmra.mxu0 %v237
        %v1175 = vpop.f32.mrf.mxu0
        %v1176 = vadd.f32 0.0, %v1175
        %1177 = vmatmul.f32.gmra.mxu0 %v240
        %v1178 = vpop.f32.mrf.mxu0
        %v1179 = vadd.f32 0.0, %v1178
        %1180 = vmatmul.f32.gmra.mxu0 %v243
        %v1181 = vpop.f32.mrf.mxu0
        %v1182 = vadd.f32 0.0, %v1181
        %1183 = vmatmul.f32.gmra.mxu0 %v246
        %v1184 = vpop.f32.mrf.mxu0
        %v1185 = vadd.f32 0.0, %v1184
        %1186 = vmatmul.f32.gmra.mxu0 %v249
        %v1187 = vpop.f32.mrf.mxu0
        %v1188 = vadd.f32 0.0, %v1187
        %1189 = vdwg.mxu0
        %1190 = vmatpush.msra.mxu0 %v773
        %1191 = vmatpush.msra.mxu0 %v764
        %1192 = vmatpush.msra.mxu0 %v755
        %1193 = vmatpush.msra.mxu0 %v746
        %1194 = vmatpush.msra.mxu0 %v737
        %1195 = vmatpush.msra.mxu0 %v728
        %1196 = vmatpush.msra.mxu0 %v719
        %1197 = vmatpush.msra.mxu0 %v710
        %1198 = vmatpush.msra.mxu0 %v701
        %1199 = vmatpush.msra.mxu0 %v692
        %1200 = vmatpush.msra.mxu0 %v683
        %1201 = vmatpush.msra.mxu0 %v674
        %1202 = vmatpush.msra.mxu0 %v665
        %1203 = vmatpush.msra.mxu0 %v656
        %1204 = vmatpush.msra.mxu0 %v647
        %1205 = vmatpush.msra.mxu0 %v638
        %1206 = vmatmul.f32.gmra.mxu0 %v232
        %v1207 = vpop.f32.mrf.mxu0
        %v1208 = vadd.f32 %v1170, %v1207
        %1209 = vmatmul.f32.gmra.mxu0 %v235
        %v1210 = vpop.f32.mrf.mxu0
        %v1211 = vadd.f32 %v1173, %v1210
        %1212 = vmatmul.f32.gmra.mxu0 %v238
        %v1213 = vpop.f32.mrf.mxu0
        %v1214 = vadd.f32 %v1176, %v1213
        %1215 = vmatmul.f32.gmra.mxu0 %v241
        %v1216 = vpop.f32.mrf.mxu0
        %v1217 = vadd.f32 %v1179, %v1216
        %1218 = vmatmul.f32.gmra.mxu0 %v244
        %v1219 = vpop.f32.mrf.mxu0
        %v1220 = vadd.f32 %v1182, %v1219
        %1221 = vmatmul.f32.gmra.mxu0 %v247
        %v1222 = vpop.f32.mrf.mxu0
        %v1223 = vadd.f32 %v1185, %v1222
        %1224 = vmatmul.f32.gmra.mxu0 %v250
        %v1225 = vpop.f32.mrf.mxu0
        %v1226 = vadd.f32 %v1188, %v1225
        %1227 = vdwg.mxu0
        %1228 = vmatpush.msra.mxu0 %v917
        %1229 = vmatpush.msra.mxu0 %v908
        %1230 = vmatpush.msra.mxu0 %v899
        %1231 = vmatpush.msra.mxu0 %v890
        %1232 = vmatpush.msra.mxu0 %v881
        %1233 = vmatpush.msra.mxu0 %v872
        %1234 = vmatpush.msra.mxu0 %v863
        %1235 = vmatpush.msra.mxu0 %v854
        %1236 = vmatpush.msra.mxu0 %v845
        %1237 = vmatpush.msra.mxu0 %v836
        %1238 = vmatpush.msra.mxu0 %v827
        %1239 = vmatpush.msra.mxu0 %v818
        %1240 = vmatpush.msra.mxu0 %v809
        %1241 = vmatpush.msra.mxu0 %v800
        %1242 = vmatpush.msra.mxu0 %v791
        %1243 = vmatpush.msra.mxu0 %v782
        %1244 = vmatmul.f32.gmra.mxu0 %v233
        %v1245 = vpop.f32.mrf.mxu0
        %v1246 = vadd.f32 %v1208, %v1245
        %1247 = vmatmul.f32.gmra.mxu0 %v236
        %v1248 = vpop.f32.mrf.mxu0
        %v1249 = vadd.f32 %v1211, %v1248
        %1250 = vmatmul.f32.gmra.mxu0 %v239
        %v1251 = vpop.f32.mrf.mxu0
        %v1252 = vadd.f32 %v1214, %v1251
        %1253 = vmatmul.f32.gmra.mxu0 %v242
        %v1254 = vpop.f32.mrf.mxu0
        %v1255 = vadd.f32 %v1217, %v1254
        %1256 = vmatmul.f32.gmra.mxu0 %v245
        %v1257 = vpop.f32.mrf.mxu0
        %v1258 = vadd.f32 %v1220, %v1257
        %1259 = vmatmul.f32.gmra.mxu0 %v248
        %v1260 = vpop.f32.mrf.mxu0
        %v1261 = vadd.f32 %v1223, %v1260
        %1262 = vmatmul.f32.gmra.mxu0 %v251
        %v1263 = vpop.f32.mrf.mxu0
        %v1264 = vadd.f32 %v1226, %v1263
        %1265 = vdwg.mxu0
        %1266 = vmatpush.msra.mxu0 %v630
        %1267 = vmatpush.msra.mxu0 %v621
        %1268 = vmatpush.msra.mxu0 %v612
        %1269 = vmatpush.msra.mxu0 %v603
        %1270 = vmatpush.msra.mxu0 %v594
        %1271 = vmatpush.msra.mxu0 %v585
        %1272 = vmatpush.msra.mxu0 %v576
        %1273 = vmatpush.msra.mxu0 %v567
        %1274 = vmatpush.msra.mxu0 %v558
        %1275 = vmatpush.msra.mxu0 %v549
        %1276 = vmatpush.msra.mxu0 %v540
        %1277 = vmatpush.msra.mxu0 %v531
        %1278 = vmatpush.msra.mxu0 %v522
        %1279 = vmatpush.msra.mxu0 %v513
        %1280 = vmatpush.msra.mxu0 %v504
        %1281 = vmatpush.msra.mxu0 %v495
        %1282 = vmatmul.f32.gmra.mxu0 %v231
        %v1283 = vpop.f32.mrf.mxu0
        %v1284 = vadd.f32 0.0, %v1283
        %1285 = vmatmul.f32.gmra.mxu0 %v234
        %v1286 = vpop.f32.mrf.mxu0
        %v1287 = vadd.f32 0.0, %v1286
        %1288 = vmatmul.f32.gmra.mxu0 %v237
        %v1289 = vpop.f32.mrf.mxu0
        %v1290 = vadd.f32 0.0, %v1289
        %1291 = vmatmul.f32.gmra.mxu0 %v240
        %v1292 = vpop.f32.mrf.mxu0
        %v1293 = vadd.f32 0.0, %v1292
        %1294 = vmatmul.f32.gmra.mxu0 %v243
        %v1295 = vpop.f32.mrf.mxu0
        %v1296 = vadd.f32 0.0, %v1295
        %1297 = vmatmul.f32.gmra.mxu0 %v246
        %v1298 = vpop.f32.mrf.mxu0
        %v1299 = vadd.f32 0.0, %v1298
        %1300 = vmatmul.f32.gmra.mxu0 %v249
        %v1301 = vpop.f32.mrf.mxu0
        %v1302 = vadd.f32 0.0, %v1301
        %1303 = vdwg.mxu0
        %1304 = vmatpush.msra.mxu0 %v774
        %1305 = vmatpush.msra.mxu0 %v765
        %1306 = vmatpush.msra.mxu0 %v756
        %1307 = vmatpush.msra.mxu0 %v747
        %1308 = vmatpush.msra.mxu0 %v738
        %1309 = vmatpush.msra.mxu0 %v729
        %1310 = vmatpush.msra.mxu0 %v720
        %1311 = vmatpush.msra.mxu0 %v711
        %1312 = vmatpush.msra.mxu0 %v702
        %1313 = vmatpush.msra.mxu0 %v693
        %1314 = vmatpush.msra.mxu0 %v684
        %1315 = vmatpush.msra.mxu0 %v675
        %1316 = vmatpush.msra.mxu0 %v666
        %1317 = vmatpush.msra.mxu0 %v657
        %1318 = vmatpush.msra.mxu0 %v648
        %1319 = vmatpush.msra.mxu0 %v639
        %1320 = vmatmul.f32.gmra.mxu0 %v232
        %v1321 = vpop.f32.mrf.mxu0
        %v1322 = vadd.f32 %v1284, %v1321
        %1323 = vmatmul.f32.gmra.mxu0 %v235
        %v1324 = vpop.f32.mrf.mxu0
        %v1325 = vadd.f32 %v1287, %v1324
        %1326 = vmatmul.f32.gmra.mxu0 %v238
        %v1327 = vpop.f32.mrf.mxu0
        %v1328 = vadd.f32 %v1290, %v1327
        %1329 = vmatmul.f32.gmra.mxu0 %v241
        %v1330 = vpop.f32.mrf.mxu0
        %v1331 = vadd.f32 %v1293, %v1330
        %1332 = vmatmul.f32.gmra.mxu0 %v244
        %v1333 = vpop.f32.mrf.mxu0
        %v1334 = vadd.f32 %v1296, %v1333
        %1335 = vmatmul.f32.gmra.mxu0 %v247
        %v1336 = vpop.f32.mrf.mxu0
        %v1337 = vadd.f32 %v1299, %v1336
        %1338 = vmatmul.f32.gmra.mxu0 %v250
        %v1339 = vpop.f32.mrf.mxu0
        %v1340 = vadd.f32 %v1302, %v1339
        %1341 = vdwg.mxu0
        %1342 = vmatpush.msra.mxu0 %v918
        %1343 = vmatpush.msra.mxu0 %v909
        %1344 = vmatpush.msra.mxu0 %v900
        %1345 = vmatpush.msra.mxu0 %v891
        %1346 = vmatpush.msra.mxu0 %v882
        %1347 = vmatpush.msra.mxu0 %v873
        %1348 = vmatpush.msra.mxu0 %v864
        %1349 = vmatpush.msra.mxu0 %v855
        %1350 = vmatpush.msra.mxu0 %v846
        %1351 = vmatpush.msra.mxu0 %v837
        %1352 = vmatpush.msra.mxu0 %v828
        %1353 = vmatpush.msra.mxu0 %v819
        %1354 = vmatpush.msra.mxu0 %v810
        %1355 = vmatpush.msra.mxu0 %v801
        %1356 = vmatpush.msra.mxu0 %v792
        %1357 = vmatpush.msra.mxu0 %v783
        %1358 = vmatmul.f32.gmra.mxu0 %v233
        %v1359 = vpop.f32.mrf.mxu0
        %v1360 = vadd.f32 %v1322, %v1359
        %1361 = vmatmul.f32.gmra.mxu0 %v236
        %v1362 = vpop.f32.mrf.mxu0
        %v1363 = vadd.f32 %v1325, %v1362
        %1364 = vmatmul.f32.gmra.mxu0 %v239
        %v1365 = vpop.f32.mrf.mxu0
        %v1366 = vadd.f32 %v1328, %v1365
        %1367 = vmatmul.f32.gmra.mxu0 %v242
        %v1368 = vpop.f32.mrf.mxu0
        %v1369 = vadd.f32 %v1331, %v1368
        %1370 = vmatmul.f32.gmra.mxu0 %v245
        %v1371 = vpop.f32.mrf.mxu0
        %v1372 = vadd.f32 %v1334, %v1371
        %1373 = vmatmul.f32.gmra.mxu0 %v248
        %v1374 = vpop.f32.mrf.mxu0
        %v1375 = vadd.f32 %v1337, %v1374
        %1376 = vmatmul.f32.gmra.mxu0 %v251
        %v1377 = vpop.f32.mrf.mxu0
        %v1378 = vadd.f32 %v1340, %v1377
        %1379 = vdwg.mxu0
        %1380 = vmatpush.msra.mxu0 %v631
        %1381 = vmatpush.msra.mxu0 %v622
        %1382 = vmatpush.msra.mxu0 %v613
        %1383 = vmatpush.msra.mxu0 %v604
        %1384 = vmatpush.msra.mxu0 %v595
        %1385 = vmatpush.msra.mxu0 %v586
        %1386 = vmatpush.msra.mxu0 %v577
        %1387 = vmatpush.msra.mxu0 %v568
        %1388 = vmatpush.msra.mxu0 %v559
        %1389 = vmatpush.msra.mxu0 %v550
        %1390 = vmatpush.msra.mxu0 %v541
        %1391 = vmatpush.msra.mxu0 %v532
        %1392 = vmatpush.msra.mxu0 %v523
        %1393 = vmatpush.msra.mxu0 %v514
        %1394 = vmatpush.msra.mxu0 %v505
        %1395 = vmatpush.msra.mxu0 %v496
        %1396 = vmatmul.f32.gmra.mxu0 %v231
        %v1397 = vpop.f32.mrf.mxu0
        %v1398 = vadd.f32 0.0, %v1397
        %1399 = vmatmul.f32.gmra.mxu0 %v234
        %v1400 = vpop.f32.mrf.mxu0
        %v1401 = vadd.f32 0.0, %v1400
        %1402 = vmatmul.f32.gmra.mxu0 %v237
        %v1403 = vpop.f32.mrf.mxu0
        %v1404 = vadd.f32 0.0, %v1403
        %1405 = vmatmul.f32.gmra.mxu0 %v240
        %v1406 = vpop.f32.mrf.mxu0
        %v1407 = vadd.f32 0.0, %v1406
        %1408 = vmatmul.f32.gmra.mxu0 %v243
        %v1409 = vpop.f32.mrf.mxu0
        %v1410 = vadd.f32 0.0, %v1409
        %1411 = vmatmul.f32.gmra.mxu0 %v246
        %v1412 = vpop.f32.mrf.mxu0
        %v1413 = vadd.f32 0.0, %v1412
        %1414 = vmatmul.f32.gmra.mxu0 %v249
        %v1415 = vpop.f32.mrf.mxu0
        %v1416 = vadd.f32 0.0, %v1415
        %1417 = vdwg.mxu0
        %1418 = vmatpush.msra.mxu0 %v775
        %1419 = vmatpush.msra.mxu0 %v766
        %1420 = vmatpush.msra.mxu0 %v757
        %1421 = vmatpush.msra.mxu0 %v748
        %1422 = vmatpush.msra.mxu0 %v739
        %1423 = vmatpush.msra.mxu0 %v730
        %1424 = vmatpush.msra.mxu0 %v721
        %1425 = vmatpush.msra.mxu0 %v712
        %1426 = vmatpush.msra.mxu0 %v703
        %1427 = vmatpush.msra.mxu0 %v694
        %1428 = vmatpush.msra.mxu0 %v685
        %1429 = vmatpush.msra.mxu0 %v676
        %1430 = vmatpush.msra.mxu0 %v667
        %1431 = vmatpush.msra.mxu0 %v658
        %1432 = vmatpush.msra.mxu0 %v649
        %1433 = vmatpush.msra.mxu0 %v640
        %1434 = vmatmul.f32.gmra.mxu0 %v232
        %v1435 = vpop.f32.mrf.mxu0
        %v1436 = vadd.f32 %v1398, %v1435
        %1437 = vmatmul.f32.gmra.mxu0 %v235
        %v1438 = vpop.f32.mrf.mxu0
        %v1439 = vadd.f32 %v1401, %v1438
        %1440 = vmatmul.f32.gmra.mxu0 %v238
        %v1441 = vpop.f32.mrf.mxu0
        %v1442 = vadd.f32 %v1404, %v1441
        %1443 = vmatmul.f32.gmra.mxu0 %v241
        %v1444 = vpop.f32.mrf.mxu0
        %v1445 = vadd.f32 %v1407, %v1444
        %1446 = vmatmul.f32.gmra.mxu0 %v244
        %v1447 = vpop.f32.mrf.mxu0
        %v1448 = vadd.f32 %v1410, %v1447
        %1449 = vmatmul.f32.gmra.mxu0 %v247
        %v1450 = vpop.f32.mrf.mxu0
        %v1451 = vadd.f32 %v1413, %v1450
        %1452 = vmatmul.f32.gmra.mxu0 %v250
        %v1453 = vpop.f32.mrf.mxu0
        %v1454 = vadd.f32 %v1416, %v1453
        %1455 = vdwg.mxu0
        %1456 = vmatpush.msra.mxu0 %v919
        %1457 = vmatpush.msra.mxu0 %v910
        %1458 = vmatpush.msra.mxu0 %v901
        %1459 = vmatpush.msra.mxu0 %v892
        %1460 = vmatpush.msra.mxu0 %v883
        %1461 = vmatpush.msra.mxu0 %v874
        %1462 = vmatpush.msra.mxu0 %v865
        %1463 = vmatpush.msra.mxu0 %v856
        %1464 = vmatpush.msra.mxu0 %v847
        %1465 = vmatpush.msra.mxu0 %v838
        %1466 = vmatpush.msra.mxu0 %v829
        %1467 = vmatpush.msra.mxu0 %v820
        %1468 = vmatpush.msra.mxu0 %v811
        %1469 = vmatpush.msra.mxu0 %v802
        %1470 = vmatpush.msra.mxu0 %v793
        %1471 = vmatpush.msra.mxu0 %v784
        %1472 = vmatmul.f32.gmra.mxu0 %v233
        %v1473 = vpop.f32.mrf.mxu0
        %v1474 = vadd.f32 %v1436, %v1473
        %1475 = vmatmul.f32.gmra.mxu0 %v236
        %v1476 = vpop.f32.mrf.mxu0
        %v1477 = vadd.f32 %v1439, %v1476
        %1478 = vmatmul.f32.gmra.mxu0 %v239
        %v1479 = vpop.f32.mrf.mxu0
        %v1480 = vadd.f32 %v1442, %v1479
        %1481 = vmatmul.f32.gmra.mxu0 %v242
        %v1482 = vpop.f32.mrf.mxu0
        %v1483 = vadd.f32 %v1445, %v1482
        %1484 = vmatmul.f32.gmra.mxu0 %v245
        %v1485 = vpop.f32.mrf.mxu0
        %v1486 = vadd.f32 %v1448, %v1485
        %1487 = vmatmul.f32.gmra.mxu0 %v248
        %v1488 = vpop.f32.mrf.mxu0
        %v1489 = vadd.f32 %v1451, %v1488
        %1490 = vmatmul.f32.gmra.mxu0 %v251
        %v1491 = vpop.f32.mrf.mxu0
        %v1492 = vadd.f32 %v1454, %v1491
        %1493 = vdwg.mxu0
        %1494 = vmatpush.msra.mxu0 %v632
        %1495 = vmatpush.msra.mxu0 %v623
        %1496 = vmatpush.msra.mxu0 %v614
        %1497 = vmatpush.msra.mxu0 %v605
        %1498 = vmatpush.msra.mxu0 %v596
        %1499 = vmatpush.msra.mxu0 %v587
        %1500 = vmatpush.msra.mxu0 %v578
        %1501 = vmatpush.msra.mxu0 %v569
        %1502 = vmatpush.msra.mxu0 %v560
        %1503 = vmatpush.msra.mxu0 %v551
        %1504 = vmatpush.msra.mxu0 %v542
        %1505 = vmatpush.msra.mxu0 %v533
        %1506 = vmatpush.msra.mxu0 %v524
        %1507 = vmatpush.msra.mxu0 %v515
        %1508 = vmatpush.msra.mxu0 %v506
        %1509 = vmatpush.msra.mxu0 %v497
        %1510 = vmatmul.f32.gmra.mxu0 %v231
        %v1511 = vpop.f32.mrf.mxu0
        %v1512 = vadd.f32 0.0, %v1511
        %1513 = vmatmul.f32.gmra.mxu0 %v234
        %v1514 = vpop.f32.mrf.mxu0
        %v1515 = vadd.f32 0.0, %v1514
        %1516 = vmatmul.f32.gmra.mxu0 %v237
        %v1517 = vpop.f32.mrf.mxu0
        %v1518 = vadd.f32 0.0, %v1517
        %1519 = vmatmul.f32.gmra.mxu0 %v240
        %v1520 = vpop.f32.mrf.mxu0
        %v1521 = vadd.f32 0.0, %v1520
        %1522 = vmatmul.f32.gmra.mxu0 %v243
        %v1523 = vpop.f32.mrf.mxu0
        %v1524 = vadd.f32 0.0, %v1523
        %1525 = vmatmul.f32.gmra.mxu0 %v246
        %v1526 = vpop.f32.mrf.mxu0
        %v1527 = vadd.f32 0.0, %v1526
        %1528 = vmatmul.f32.gmra.mxu0 %v249
        %v1529 = vpop.f32.mrf.mxu0
        %v1530 = vadd.f32 0.0, %v1529
        %1531 = vdwg.mxu0
        %1532 = vmatpush.msra.mxu0 %v776
        %1533 = vmatpush.msra.mxu0 %v767
        %1534 = vmatpush.msra.mxu0 %v758
        %1535 = vmatpush.msra.mxu0 %v749
        %1536 = vmatpush.msra.mxu0 %v740
        %1537 = vmatpush.msra.mxu0 %v731
        %1538 = vmatpush.msra.mxu0 %v722
        %1539 = vmatpush.msra.mxu0 %v713
        %1540 = vmatpush.msra.mxu0 %v704
        %1541 = vmatpush.msra.mxu0 %v695
        %1542 = vmatpush.msra.mxu0 %v686
        %1543 = vmatpush.msra.mxu0 %v677
        %1544 = vmatpush.msra.mxu0 %v668
        %1545 = vmatpush.msra.mxu0 %v659
        %1546 = vmatpush.msra.mxu0 %v650
        %1547 = vmatpush.msra.mxu0 %v641
        %1548 = vmatmul.f32.gmra.mxu0 %v232
        %v1549 = vpop.f32.mrf.mxu0
        %v1550 = vadd.f32 %v1512, %v1549
        %1551 = vmatmul.f32.gmra.mxu0 %v235
        %v1552 = vpop.f32.mrf.mxu0
        %v1553 = vadd.f32 %v1515, %v1552
        %1554 = vmatmul.f32.gmra.mxu0 %v238
        %v1555 = vpop.f32.mrf.mxu0
        %v1556 = vadd.f32 %v1518, %v1555
        %1557 = vmatmul.f32.gmra.mxu0 %v241
        %v1558 = vpop.f32.mrf.mxu0
        %v1559 = vadd.f32 %v1521, %v1558
        %1560 = vmatmul.f32.gmra.mxu0 %v244
        %v1561 = vpop.f32.mrf.mxu0
        %v1562 = vadd.f32 %v1524, %v1561
        %1563 = vmatmul.f32.gmra.mxu0 %v247
        %v1564 = vpop.f32.mrf.mxu0
        %v1565 = vadd.f32 %v1527, %v1564
        %1566 = vmatmul.f32.gmra.mxu0 %v250
        %v1567 = vpop.f32.mrf.mxu0
        %v1568 = vadd.f32 %v1530, %v1567
        %1569 = vdwg.mxu0
        %1570 = vmatpush.msra.mxu0 %v920
        %1571 = vmatpush.msra.mxu0 %v911
        %1572 = vmatpush.msra.mxu0 %v902
        %1573 = vmatpush.msra.mxu0 %v893
        %1574 = vmatpush.msra.mxu0 %v884
        %1575 = vmatpush.msra.mxu0 %v875
        %1576 = vmatpush.msra.mxu0 %v866
        %1577 = vmatpush.msra.mxu0 %v857
        %1578 = vmatpush.msra.mxu0 %v848
        %1579 = vmatpush.msra.mxu0 %v839
        %1580 = vmatpush.msra.mxu0 %v830
        %1581 = vmatpush.msra.mxu0 %v821
        %1582 = vmatpush.msra.mxu0 %v812
        %1583 = vmatpush.msra.mxu0 %v803
        %1584 = vmatpush.msra.mxu0 %v794
        %1585 = vmatpush.msra.mxu0 %v785
        %1586 = vmatmul.f32.gmra.mxu0 %v233
        %v1587 = vpop.f32.mrf.mxu0
        %v1588 = vadd.f32 %v1550, %v1587
        %1589 = vmatmul.f32.gmra.mxu0 %v236
        %v1590 = vpop.f32.mrf.mxu0
        %v1591 = vadd.f32 %v1553, %v1590
        %1592 = vmatmul.f32.gmra.mxu0 %v239
        %v1593 = vpop.f32.mrf.mxu0
        %v1594 = vadd.f32 %v1556, %v1593
        %1595 = vmatmul.f32.gmra.mxu0 %v242
        %v1596 = vpop.f32.mrf.mxu0
        %v1597 = vadd.f32 %v1559, %v1596
        %1598 = vmatmul.f32.gmra.mxu0 %v245
        %v1599 = vpop.f32.mrf.mxu0
        %v1600 = vadd.f32 %v1562, %v1599
        %1601 = vmatmul.f32.gmra.mxu0 %v248
        %v1602 = vpop.f32.mrf.mxu0
        %v1603 = vadd.f32 %v1565, %v1602
        %1604 = vmatmul.f32.gmra.mxu0 %v251
        %v1605 = vpop.f32.mrf.mxu0
        %v1606 = vadd.f32 %v1568, %v1605
        %1607 = vdwg.mxu0
        %1608 = vmatpush.msra.mxu0 %v633
        %1609 = vmatpush.msra.mxu0 %v624
        %1610 = vmatpush.msra.mxu0 %v615
        %1611 = vmatpush.msra.mxu0 %v606
        %1612 = vmatpush.msra.mxu0 %v597
        %1613 = vmatpush.msra.mxu0 %v588
        %1614 = vmatpush.msra.mxu0 %v579
        %1615 = vmatpush.msra.mxu0 %v570
        %1616 = vmatpush.msra.mxu0 %v561
        %1617 = vmatpush.msra.mxu0 %v552
        %1618 = vmatpush.msra.mxu0 %v543
        %1619 = vmatpush.msra.mxu0 %v534
        %1620 = vmatpush.msra.mxu0 %v525
        %1621 = vmatpush.msra.mxu0 %v516
        %1622 = vmatpush.msra.mxu0 %v507
        %1623 = vmatpush.msra.mxu0 %v498
        %1624 = vmatmul.f32.gmra.mxu0 %v231
        %v1625 = vpop.f32.mrf.mxu0
        %v1626 = vadd.f32 0.0, %v1625
        %1627 = vmatmul.f32.gmra.mxu0 %v234
        %v1628 = vpop.f32.mrf.mxu0
        %v1629 = vadd.f32 0.0, %v1628
        %1630 = vmatmul.f32.gmra.mxu0 %v237
        %v1631 = vpop.f32.mrf.mxu0
        %v1632 = vadd.f32 0.0, %v1631
        %1633 = vmatmul.f32.gmra.mxu0 %v240
        %v1634 = vpop.f32.mrf.mxu0
        %v1635 = vadd.f32 0.0, %v1634
        %1636 = vmatmul.f32.gmra.mxu0 %v243
        %v1637 = vpop.f32.mrf.mxu0
        %v1638 = vadd.f32 0.0, %v1637
        %1639 = vmatmul.f32.gmra.mxu0 %v246
        %v1640 = vpop.f32.mrf.mxu0
        %v1641 = vadd.f32 0.0, %v1640
        %1642 = vmatmul.f32.gmra.mxu0 %v249
        %v1643 = vpop.f32.mrf.mxu0
        %v1644 = vadd.f32 0.0, %v1643
        %1645 = vdwg.mxu0
        %1646 = vmatpush.msra.mxu0 %v777
        %1647 = vmatpush.msra.mxu0 %v768
        %1648 = vmatpush.msra.mxu0 %v759
        %1649 = vmatpush.msra.mxu0 %v750
        %1650 = vmatpush.msra.mxu0 %v741
        %1651 = vmatpush.msra.mxu0 %v732
        %1652 = vmatpush.msra.mxu0 %v723
        %1653 = vmatpush.msra.mxu0 %v714
        %1654 = vmatpush.msra.mxu0 %v705
        %1655 = vmatpush.msra.mxu0 %v696
        %1656 = vmatpush.msra.mxu0 %v687
        %1657 = vmatpush.msra.mxu0 %v678
        %1658 = vmatpush.msra.mxu0 %v669
        %1659 = vmatpush.msra.mxu0 %v660
        %1660 = vmatpush.msra.mxu0 %v651
        %1661 = vmatpush.msra.mxu0 %v642
        %1662 = vmatmul.f32.gmra.mxu0 %v232
        %v1663 = vpop.f32.mrf.mxu0
        %v1664 = vadd.f32 %v1626, %v1663
        %1665 = vmatmul.f32.gmra.mxu0 %v235
        %v1666 = vpop.f32.mrf.mxu0
        %v1667 = vadd.f32 %v1629, %v1666
        %1668 = vmatmul.f32.gmra.mxu0 %v238
        %v1669 = vpop.f32.mrf.mxu0
        %v1670 = vadd.f32 %v1632, %v1669
        %1671 = vmatmul.f32.gmra.mxu0 %v241
        %v1672 = vpop.f32.mrf.mxu0
        %v1673 = vadd.f32 %v1635, %v1672
        %1674 = vmatmul.f32.gmra.mxu0 %v244
        %v1675 = vpop.f32.mrf.mxu0
        %v1676 = vadd.f32 %v1638, %v1675
        %1677 = vmatmul.f32.gmra.mxu0 %v247
        %v1678 = vpop.f32.mrf.mxu0
        %v1679 = vadd.f32 %v1641, %v1678
        %1680 = vmatmul.f32.gmra.mxu0 %v250
        %v1681 = vpop.f32.mrf.mxu0
        %v1682 = vadd.f32 %v1644, %v1681
        %1683 = vdwg.mxu0
        %1684 = vmatpush.msra.mxu0 %v921
        %1685 = vmatpush.msra.mxu0 %v912
        %1686 = vmatpush.msra.mxu0 %v903
        %1687 = vmatpush.msra.mxu0 %v894
        %1688 = vmatpush.msra.mxu0 %v885
        %1689 = vmatpush.msra.mxu0 %v876
        %1690 = vmatpush.msra.mxu0 %v867
        %1691 = vmatpush.msra.mxu0 %v858
        %1692 = vmatpush.msra.mxu0 %v849
        %1693 = vmatpush.msra.mxu0 %v840
        %1694 = vmatpush.msra.mxu0 %v831
        %1695 = vmatpush.msra.mxu0 %v822
        %1696 = vmatpush.msra.mxu0 %v813
        %1697 = vmatpush.msra.mxu0 %v804
        %1698 = vmatpush.msra.mxu0 %v795
        %1699 = vmatpush.msra.mxu0 %v786
        %1700 = vmatmul.f32.gmra.mxu0 %v233
        %v1701 = vpop.f32.mrf.mxu0
        %v1702 = vadd.f32 %v1664, %v1701
        %1703 = vmatmul.f32.gmra.mxu0 %v236
        %v1704 = vpop.f32.mrf.mxu0
        %v1705 = vadd.f32 %v1667, %v1704
        %1706 = vmatmul.f32.gmra.mxu0 %v239
        %v1707 = vpop.f32.mrf.mxu0
        %v1708 = vadd.f32 %v1670, %v1707
        %1709 = vmatmul.f32.gmra.mxu0 %v242
        %v1710 = vpop.f32.mrf.mxu0
        %v1711 = vadd.f32 %v1673, %v1710
        %1712 = vmatmul.f32.gmra.mxu0 %v245
        %v1713 = vpop.f32.mrf.mxu0
        %v1714 = vadd.f32 %v1676, %v1713
        %1715 = vmatmul.f32.gmra.mxu0 %v248
        %v1716 = vpop.f32.mrf.mxu0
        %v1717 = vadd.f32 %v1679, %v1716
        %1718 = vmatmul.f32.gmra.mxu0 %v251
        %v1719 = vpop.f32.mrf.mxu0
        %v1720 = vadd.f32 %v1682, %v1719
        %1721 = vdwg.mxu0
        %1722 = vmatpush.msra.mxu0 %v634
        %1723 = vmatpush.msra.mxu0 %v625
        %1724 = vmatpush.msra.mxu0 %v616
        %1725 = vmatpush.msra.mxu0 %v607
        %1726 = vmatpush.msra.mxu0 %v598
        %1727 = vmatpush.msra.mxu0 %v589
        %1728 = vmatpush.msra.mxu0 %v580
        %1729 = vmatpush.msra.mxu0 %v571
        %1730 = vmatpush.msra.mxu0 %v562
        %1731 = vmatpush.msra.mxu0 %v553
        %1732 = vmatpush.msra.mxu0 %v544
        %1733 = vmatpush.msra.mxu0 %v535
        %1734 = vmatpush.msra.mxu0 %v526
        %1735 = vmatpush.msra.mxu0 %v517
        %1736 = vmatpush.msra.mxu0 %v508
        %1737 = vmatpush.msra.mxu0 %v499
        %1738 = vmatmul.f32.gmra.mxu0 %v231
        %v1739 = vpop.f32.mrf.mxu0
        %v1740 = vadd.f32 0.0, %v1739
        %1741 = vmatmul.f32.gmra.mxu0 %v234
        %v1742 = vpop.f32.mrf.mxu0
        %v1743 = vadd.f32 0.0, %v1742
        %1744 = vmatmul.f32.gmra.mxu0 %v237
        %v1745 = vpop.f32.mrf.mxu0
        %v1746 = vadd.f32 0.0, %v1745
        %1747 = vmatmul.f32.gmra.mxu0 %v240
        %v1748 = vpop.f32.mrf.mxu0
        %v1749 = vadd.f32 0.0, %v1748
        %1750 = vmatmul.f32.gmra.mxu0 %v243
        %v1751 = vpop.f32.mrf.mxu0
        %v1752 = vadd.f32 0.0, %v1751
        %1753 = vmatmul.f32.gmra.mxu0 %v246
        %v1754 = vpop.f32.mrf.mxu0
        %v1755 = vadd.f32 0.0, %v1754
        %1756 = vmatmul.f32.gmra.mxu0 %v249
        %v1757 = vpop.f32.mrf.mxu0
        %v1758 = vadd.f32 0.0, %v1757
        %1759 = vdwg.mxu0
        %1760 = vmatpush.msra.mxu0 %v778
        %1761 = vmatpush.msra.mxu0 %v769
        %1762 = vmatpush.msra.mxu0 %v760
        %1763 = vmatpush.msra.mxu0 %v751
        %1764 = vmatpush.msra.mxu0 %v742
        %1765 = vmatpush.msra.mxu0 %v733
        %1766 = vmatpush.msra.mxu0 %v724
        %1767 = vmatpush.msra.mxu0 %v715
        %1768 = vmatpush.msra.mxu0 %v706
        %1769 = vmatpush.msra.mxu0 %v697
        %1770 = vmatpush.msra.mxu0 %v688
        %1771 = vmatpush.msra.mxu0 %v679
        %1772 = vmatpush.msra.mxu0 %v670
        %1773 = vmatpush.msra.mxu0 %v661
        %1774 = vmatpush.msra.mxu0 %v652
        %1775 = vmatpush.msra.mxu0 %v643
        %1776 = vmatmul.f32.gmra.mxu0 %v232
        %v1777 = vpop.f32.mrf.mxu0
        %v1778 = vadd.f32 %v1740, %v1777
        %1779 = vmatmul.f32.gmra.mxu0 %v235
        %v1780 = vpop.f32.mrf.mxu0
        %v1781 = vadd.f32 %v1743, %v1780
        %1782 = vmatmul.f32.gmra.mxu0 %v238
        %v1783 = vpop.f32.mrf.mxu0
        %v1784 = vadd.f32 %v1746, %v1783
        %1785 = vmatmul.f32.gmra.mxu0 %v241
        %v1786 = vpop.f32.mrf.mxu0
        %v1787 = vadd.f32 %v1749, %v1786
        %1788 = vmatmul.f32.gmra.mxu0 %v244
        %v1789 = vpop.f32.mrf.mxu0
        %v1790 = vadd.f32 %v1752, %v1789
        %1791 = vmatmul.f32.gmra.mxu0 %v247
        %v1792 = vpop.f32.mrf.mxu0
        %v1793 = vadd.f32 %v1755, %v1792
        %1794 = vmatmul.f32.gmra.mxu0 %v250
        %v1795 = vpop.f32.mrf.mxu0
        %v1796 = vadd.f32 %v1758, %v1795
        %1797 = vdwg.mxu0
        %1798 = vmatpush.msra.mxu0 %v922
        %1799 = vmatpush.msra.mxu0 %v913
        %1800 = vmatpush.msra.mxu0 %v904
        %1801 = vmatpush.msra.mxu0 %v895
        %1802 = vmatpush.msra.mxu0 %v886
        %1803 = vmatpush.msra.mxu0 %v877
        %1804 = vmatpush.msra.mxu0 %v868
        %1805 = vmatpush.msra.mxu0 %v859
        %1806 = vmatpush.msra.mxu0 %v850
        %1807 = vmatpush.msra.mxu0 %v841
        %1808 = vmatpush.msra.mxu0 %v832
        %1809 = vmatpush.msra.mxu0 %v823
        %1810 = vmatpush.msra.mxu0 %v814
        %1811 = vmatpush.msra.mxu0 %v805
        %1812 = vmatpush.msra.mxu0 %v796
        %1813 = vmatpush.msra.mxu0 %v787
        %1814 = vmatmul.f32.gmra.mxu0 %v233
        %v1815 = vpop.f32.mrf.mxu0
        %v1816 = vadd.f32 %v1778, %v1815
        %1817 = vmatmul.f32.gmra.mxu0 %v236
        %v1818 = vpop.f32.mrf.mxu0
        %v1819 = vadd.f32 %v1781, %v1818
        %1820 = vmatmul.f32.gmra.mxu0 %v239
        %v1821 = vpop.f32.mrf.mxu0
        %v1822 = vadd.f32 %v1784, %v1821
        %1823 = vmatmul.f32.gmra.mxu0 %v242
        %v1824 = vpop.f32.mrf.mxu0
        %v1825 = vadd.f32 %v1787, %v1824
        %1826 = vmatmul.f32.gmra.mxu0 %v245
        %v1827 = vpop.f32.mrf.mxu0
        %v1828 = vadd.f32 %v1790, %v1827
        %1829 = vmatmul.f32.gmra.mxu0 %v248
        %v1830 = vpop.f32.mrf.mxu0
        %v1831 = vadd.f32 %v1793, %v1830
        %1832 = vmatmul.f32.gmra.mxu0 %v251
        %v1833 = vpop.f32.mrf.mxu0
        %v1834 = vadd.f32 %v1796, %v1833
        %1835 = vdwg.mxu0
        %1836 = vmatpush.msra.mxu0 %v635
        %1837 = vmatpush.msra.mxu0 %v626
        %1838 = vmatpush.msra.mxu0 %v617
        %1839 = vmatpush.msra.mxu0 %v608
        %1840 = vmatpush.msra.mxu0 %v599
        %1841 = vmatpush.msra.mxu0 %v590
        %1842 = vmatpush.msra.mxu0 %v581
        %1843 = vmatpush.msra.mxu0 %v572
        %1844 = vmatpush.msra.mxu0 %v563
        %1845 = vmatpush.msra.mxu0 %v554
        %1846 = vmatpush.msra.mxu0 %v545
        %1847 = vmatpush.msra.mxu0 %v536
        %1848 = vmatpush.msra.mxu0 %v527
        %1849 = vmatpush.msra.mxu0 %v518
        %1850 = vmatpush.msra.mxu0 %v509
        %1851 = vmatpush.msra.mxu0 %v500
        %1852 = vmatmul.f32.gmra.mxu0 %v231
        %v1853 = vpop.f32.mrf.mxu0
        %v1854 = vadd.f32 0.0, %v1853
        %1855 = vmatmul.f32.gmra.mxu0 %v234
        %v1856 = vpop.f32.mrf.mxu0
        %v1857 = vadd.f32 0.0, %v1856
        %1858 = vmatmul.f32.gmra.mxu0 %v237
        %v1859 = vpop.f32.mrf.mxu0
        %v1860 = vadd.f32 0.0, %v1859
        %1861 = vmatmul.f32.gmra.mxu0 %v240
        %v1862 = vpop.f32.mrf.mxu0
        %v1863 = vadd.f32 0.0, %v1862
        %1864 = vmatmul.f32.gmra.mxu0 %v243
        %v1865 = vpop.f32.mrf.mxu0
        %v1866 = vadd.f32 0.0, %v1865
        %1867 = vmatmul.f32.gmra.mxu0 %v246
        %v1868 = vpop.f32.mrf.mxu0
        %v1869 = vadd.f32 0.0, %v1868
        %1870 = vmatmul.f32.gmra.mxu0 %v249
        %v1871 = vpop.f32.mrf.mxu0
        %v1872 = vadd.f32 0.0, %v1871
        %1873 = vdwg.mxu0
        %1874 = vmatpush.msra.mxu0 %v779
        %1875 = vmatpush.msra.mxu0 %v770
        %1876 = vmatpush.msra.mxu0 %v761
        %1877 = vmatpush.msra.mxu0 %v752
        %1878 = vmatpush.msra.mxu0 %v743
        %1879 = vmatpush.msra.mxu0 %v734
        %1880 = vmatpush.msra.mxu0 %v725
        %1881 = vmatpush.msra.mxu0 %v716
        %1882 = vmatpush.msra.mxu0 %v707
        %1883 = vmatpush.msra.mxu0 %v698
        %1884 = vmatpush.msra.mxu0 %v689
        %1885 = vmatpush.msra.mxu0 %v680
        %1886 = vmatpush.msra.mxu0 %v671
        %1887 = vmatpush.msra.mxu0 %v662
        %1888 = vmatpush.msra.mxu0 %v653
        %1889 = vmatpush.msra.mxu0 %v644
        %1890 = vmatmul.f32.gmra.mxu0 %v232
        %v1891 = vpop.f32.mrf.mxu0
        %v1892 = vadd.f32 %v1854, %v1891
        %1893 = vmatmul.f32.gmra.mxu0 %v235
        %v1894 = vpop.f32.mrf.mxu0
        %v1895 = vadd.f32 %v1857, %v1894
        %1896 = vmatmul.f32.gmra.mxu0 %v238
        %v1897 = vpop.f32.mrf.mxu0
        %v1898 = vadd.f32 %v1860, %v1897
        %1899 = vmatmul.f32.gmra.mxu0 %v241
        %v1900 = vpop.f32.mrf.mxu0
        %v1901 = vadd.f32 %v1863, %v1900
        %1902 = vmatmul.f32.gmra.mxu0 %v244
        %v1903 = vpop.f32.mrf.mxu0
        %v1904 = vadd.f32 %v1866, %v1903
        %1905 = vmatmul.f32.gmra.mxu0 %v247
        %v1906 = vpop.f32.mrf.mxu0
        %v1907 = vadd.f32 %v1869, %v1906
        %1908 = vmatmul.f32.gmra.mxu0 %v250
        %v1909 = vpop.f32.mrf.mxu0
        %v1910 = vadd.f32 %v1872, %v1909
        %1911 = vdwg.mxu0
        %1912 = vmatpush.msra.mxu0 %v923
        %1913 = vmatpush.msra.mxu0 %v914
        %1914 = vmatpush.msra.mxu0 %v905
        %1915 = vmatpush.msra.mxu0 %v896
        %1916 = vmatpush.msra.mxu0 %v887
        %1917 = vmatpush.msra.mxu0 %v878
        %1918 = vmatpush.msra.mxu0 %v869
        %1919 = vmatpush.msra.mxu0 %v860
        %1920 = vmatpush.msra.mxu0 %v851
        %1921 = vmatpush.msra.mxu0 %v842
        %1922 = vmatpush.msra.mxu0 %v833
        %1923 = vmatpush.msra.mxu0 %v824
        %1924 = vmatpush.msra.mxu0 %v815
        %1925 = vmatpush.msra.mxu0 %v806
        %1926 = vmatpush.msra.mxu0 %v797
        %1927 = vmatpush.msra.mxu0 %v788
        %1928 = vmatmul.f32.gmra.mxu0 %v233
        %v1929 = vpop.f32.mrf.mxu0
        %v1930 = vadd.f32 %v1892, %v1929
        %1931 = vmatmul.f32.gmra.mxu0 %v236
        %v1932 = vpop.f32.mrf.mxu0
        %v1933 = vadd.f32 %v1895, %v1932
        %1934 = vmatmul.f32.gmra.mxu0 %v239
        %v1935 = vpop.f32.mrf.mxu0
        %v1936 = vadd.f32 %v1898, %v1935
        %1937 = vmatmul.f32.gmra.mxu0 %v242
        %v1938 = vpop.f32.mrf.mxu0
        %v1939 = vadd.f32 %v1901, %v1938
        %1940 = vmatmul.f32.gmra.mxu0 %v245
        %v1941 = vpop.f32.mrf.mxu0
        %v1942 = vadd.f32 %v1904, %v1941
        %1943 = vmatmul.f32.gmra.mxu0 %v248
        %v1944 = vpop.f32.mrf.mxu0
        %v1945 = vadd.f32 %v1907, %v1944
        %1946 = vmatmul.f32.gmra.mxu0 %v251
        %v1947 = vpop.f32.mrf.mxu0
        %v1948 = vadd.f32 %v1910, %v1947
        %1949 = vdwg.mxu0
        %1950 = vst [vmem:[%s186] sm:$0xff] %v1018
        %1951 = vst [vmem:[%s186 + $0x8] sm:$0xff] %v1132
        %1952 = vst [vmem:[%s186 + $0x10] sm:$0xff] %v1246
        %1953 = vst [vmem:[%s186 + $0x18] sm:$0xff] %v1360
        %1954 = vst [vmem:[%s186 + $0x20] sm:$0xff] %v1474
        %1955 = vst [vmem:[%s186 + $0x28] sm:$0xff] %v1588
        %1956 = vst [vmem:[%s186 + $0x30] sm:$0xff] %v1702
        %1957 = vst [vmem:[%s186 + $0x38] sm:$0xff] %v1816
        %1958 = vst [vmem:[%s186 + $0x40] sm:$0xff] %v1930
        %1959 = vst [vmem:[%s186 + $0x48] sm:$0xff] %v1021
        %1960 = vst [vmem:[%s186 + $0x50] sm:$0xff] %v1135
        %1961 = vst [vmem:[%s186 + $0x58] sm:$0xff] %v1249
        %1962 = vst [vmem:[%s186 + $0x60] sm:$0xff] %v1363
        %1963 = vst [vmem:[%s186 + $0x68] sm:$0xff] %v1477
        %1964 = vst [vmem:[%s186 + $0x70] sm:$0xff] %v1591
        %1965 = vst [vmem:[%s186 + $0x78] sm:$0xff] %v1705
        %1966 = vst [vmem:[%s186 + $0x80] sm:$0xff] %v1819
        %1967 = vst [vmem:[%s186 + $0x88] sm:$0xff] %v1933
        %1968 = vst [vmem:[%s186 + $0x90] sm:$0xff] %v1024
        %1969 = vst [vmem:[%s186 + $0x98] sm:$0xff] %v1138
        %1970 = vst [vmem:[%s186 + $0xa0] sm:$0xff] %v1252
        %1971 = vst [vmem:[%s186 + $0xa8] sm:$0xff] %v1366
        %1972 = vst [vmem:[%s186 + $0xb0] sm:$0xff] %v1480
        %1973 = vst [vmem:[%s186 + $0xb8] sm:$0xff] %v1594
        %1974 = vst [vmem:[%s186 + $0xc0] sm:$0xff] %v1708
        %1975 = vst [vmem:[%s186 + $0xc8] sm:$0xff] %v1822
        %1976 = vst [vmem:[%s186 + $0xd0] sm:$0xff] %v1936
        %1977 = vst [vmem:[%s186 + $0xd8] sm:$0xff] %v1027
        %1978 = vst [vmem:[%s186 + $0xe0] sm:$0xff] %v1141
        %1979 = vst [vmem:[%s186 + $0xe8] sm:$0xff] %v1255
        %1980 = vst [vmem:[%s186 + $0xf0] sm:$0xff] %v1369
        %1981 = vst [vmem:[%s186 + $0xf8] sm:$0xff] %v1483
        %1982 = vst [vmem:[%s186 + $0x100] sm:$0xff] %v1597
        %1983 = vst [vmem:[%s186 + $0x108] sm:$0xff] %v1711
        %1984 = vst [vmem:[%s186 + $0x110] sm:$0xff] %v1825
        %1985 = vst [vmem:[%s186 + $0x118] sm:$0xff] %v1939
        %1986 = vst [vmem:[%s186 + $0x120] sm:$0xff] %v1030
        %1987 = vst [vmem:[%s186 + $0x128] sm:$0xff] %v1144
        %1988 = vst [vmem:[%s186 + $0x130] sm:$0xff] %v1258
        %1989 = vst [vmem:[%s186 + $0x138] sm:$0xff] %v1372
        %1990 = vst [vmem:[%s186 + $0x140] sm:$0xff] %v1486
        %1991 = vst [vmem:[%s186 + $0x148] sm:$0xff] %v1600
        %1992 = vst [vmem:[%s186 + $0x150] sm:$0xff] %v1714
        %1993 = vst [vmem:[%s186 + $0x158] sm:$0xff] %v1828
        %1994 = vst [vmem:[%s186 + $0x160] sm:$0xff] %v1942
        %1995 = vst [vmem:[%s186 + $0x168] sm:$0xff] %v1033
        %1996 = vst [vmem:[%s186 + $0x170] sm:$0xff] %v1147
        %1997 = vst [vmem:[%s186 + $0x178] sm:$0xff] %v1261
        %1998 = vst [vmem:[%s186 + $0x180] sm:$0xff] %v1375
        %1999 = vst [vmem:[%s186 + $0x188] sm:$0xff] %v1489
        %2000 = vst [vmem:[%s186 + $0x190] sm:$0xff] %v1603
        %2001 = vst [vmem:[%s186 + $0x198] sm:$0xff] %v1717
        %2002 = vst [vmem:[%s186 + $0x1a0] sm:$0xff] %v1831
        %2003 = vst [vmem:[%s186 + $0x1a8] sm:$0xff] %v1945
        %2004 = vst [vmem:[%s186 + $0x1b0] sm:$0x1] %v1036
        %2005 = vst [vmem:[%s186 + $0x1b8] sm:$0x1] %v1150
        %2006 = vst [vmem:[%s186 + $0x1c0] sm:$0x1] %v1264
        %2007 = vst [vmem:[%s186 + $0x1c8] sm:$0x1] %v1378
        %2008 = vst [vmem:[%s186 + $0x1d0] sm:$0x1] %v1492
        %2009 = vst [vmem:[%s186 + $0x1d8] sm:$0x1] %v1606
        %2010 = vst [vmem:[%s186 + $0x1e0] sm:$0x1] %v1720
        %2011 = vst [vmem:[%s186 + $0x1e8] sm:$0x1] %v1834
        %2012 = vst [vmem:[%s186 + $0x1f0] sm:$0x1] %v1948
        %s2013 = sand.u32 %s93, 1
        %s2014 = sand.u32 %s93, 1
        %s2015 = smul.addr %s2014, 504
        %s2016 = scalar_lea.vmem [#allocation4], %s2015
        // Predicated region
        $region37: #{fused_add_conv1x1.1} parent=31 // pred_check
          %p2017 = pneg %p103
        $region38: #{fused_add_conv1x1.1} parent=31 // pred_check_branch
          %2019 = sbr.rel (%p2017) target = $region40
        $region39: #{fused_add_conv1x1.1} parent=31 // pred_region
          %s2020 = smul.u32 9, %s17
          %s2021 = smul.addr %s2020, 8
          %s2022 = scalar_lea.vmem %s3, %s2021
          // Predicated region
          $region41: #{fused_add_conv1x1.1} parent=39 // pred_check
            _
          $region42: #{fused_add_conv1x1.1} parent=39 // pred_check_branch
            %2024 = sbr.rel (0) target = $region44
          $region43: #{fused_add_conv1x1.1} parent=39 // pred_region
            // Predicated region
            $region45: #{fused_add_conv1x1.1} parent=43 // pred_check
              _
            $region46: #{fused_add_conv1x1.1} parent=43 // pred_check_branch
              %2026 = sbr.rel (0) target = $region48
            $region47: #{fused_add_conv1x1.1} parent=43 // pred_region
              loop: start=0, step=1, limit=1
              $region49: #{fused_add_conv1x1.1} parent=47 // loop_pre_header
                _
              $region50: #{fused_add_conv1x1.1} parent=47 // loop_header
                %s2028 = sphi 0, %s2032
                %p2029 = scmp.ge.s32.totalorder %s2028, 1
                %s2033 = sphi %s2016, %s2016
                %s2034 = sphi %s2022, %s2022
              $region51: #{fused_add_conv1x1.1} parent=47 // loop_header_branch
                %2031 = sbr.rel (%p2029) target = $region55
              $region52: #{fused_add_conv1x1.1} parent=47 // loop_body
                %v2035 = vld [vmem:[%s2033] sm:$0xff]
                %2036 = vst [vmem:[%s2034] sm:$0xff] %v2035
                %v2037 = vld [vmem:[%s2033 + $0x8] sm:$0xff]
                %2038 = vst [vmem:[%s2034 + $0x8] sm:$0xff] %v2037
                %v2039 = vld [vmem:[%s2033 + $0x10] sm:$0xff]
                %2040 = vst [vmem:[%s2034 + $0x10] sm:$0xff] %v2039
                %v2041 = vld [vmem:[%s2033 + $0x18] sm:$0xff]
                %2042 = vst [vmem:[%s2034 + $0x18] sm:$0xff] %v2041
                %v2043 = vld [vmem:[%s2033 + $0x20] sm:$0xff]
                %2044 = vst [vmem:[%s2034 + $0x20] sm:$0xff] %v2043
                %v2045 = vld [vmem:[%s2033 + $0x28] sm:$0xff]
                %2046 = vst [vmem:[%s2034 + $0x28] sm:$0xff] %v2045
                %v2047 = vld [vmem:[%s2033 + $0x30] sm:$0xff]
                %2048 = vst [vmem:[%s2034 + $0x30] sm:$0xff] %v2047
                %v2049 = vld [vmem:[%s2033 + $0x38] sm:$0xff]
                %2050 = vst [vmem:[%s2034 + $0x38] sm:$0xff] %v2049
                %v2051 = vld [vmem:[%s2033 + $0x40] sm:$0xff]
                %2052 = vst [vmem:[%s2034 + $0x40] sm:$0xff] %v2051
                %v2053 = vld [vmem:[%s2033 + $0x48] sm:$0xff]
                %2054 = vst [vmem:[%s2034 + $0x90] sm:$0xff] %v2053
                %v2055 = vld [vmem:[%s2033 + $0x50] sm:$0xff]
                %2056 = vst [vmem:[%s2034 + $0x98] sm:$0xff] %v2055
                %v2057 = vld [vmem:[%s2033 + $0x58] sm:$0xff]
                %2058 = vst [vmem:[%s2034 + $0xa0] sm:$0xff] %v2057
                %v2059 = vld [vmem:[%s2033 + $0x60] sm:$0xff]
                %2060 = vst [vmem:[%s2034 + $0xa8] sm:$0xff] %v2059
                %v2061 = vld [vmem:[%s2033 + $0x68] sm:$0xff]
                %2062 = vst [vmem:[%s2034 + $0xb0] sm:$0xff] %v2061
                %v2063 = vld [vmem:[%s2033 + $0x70] sm:$0xff]
                %2064 = vst [vmem:[%s2034 + $0xb8] sm:$0xff] %v2063
                %v2065 = vld [vmem:[%s2033 + $0x78] sm:$0xff]
                %2066 = vst [vmem:[%s2034 + $0xc0] sm:$0xff] %v2065
                %v2067 = vld [vmem:[%s2033 + $0x80] sm:$0xff]
                %2068 = vst [vmem:[%s2034 + $0xc8] sm:$0xff] %v2067
                %v2069 = vld [vmem:[%s2033 + $0x88] sm:$0xff]
                %2070 = vst [vmem:[%s2034 + $0xd0] sm:$0xff] %v2069
                %v2071 = vld [vmem:[%s2033 + $0x90] sm:$0xff]
                %2072 = vst [vmem:[%s2034 + $0x120] sm:$0xff] %v2071
                %v2073 = vld [vmem:[%s2033 + $0x98] sm:$0xff]
                %2074 = vst [vmem:[%s2034 + $0x128] sm:$0xff] %v2073
                %v2075 = vld [vmem:[%s2033 + $0xa0] sm:$0xff]
                %2076 = vst [vmem:[%s2034 + $0x130] sm:$0xff] %v2075
                %v2077 = vld [vmem:[%s2033 + $0xa8] sm:$0xff]
                %2078 = vst [vmem:[%s2034 + $0x138] sm:$0xff] %v2077
                %v2079 = vld [vmem:[%s2033 + $0xb0] sm:$0xff]
                %2080 = vst [vmem:[%s2034 + $0x140] sm:$0xff] %v2079
                %v2081 = vld [vmem:[%s2033 + $0xb8] sm:$0xff]
                %2082 = vst [vmem:[%s2034 + $0x148] sm:$0xff] %v2081
                %v2083 = vld [vmem:[%s2033 + $0xc0] sm:$0xff]
                %2084 = vst [vmem:[%s2034 + $0x150] sm:$0xff] %v2083
                %v2085 = vld [vmem:[%s2033 + $0xc8] sm:$0xff]
                %2086 = vst [vmem:[%s2034 + $0x158] sm:$0xff] %v2085
                %v2087 = vld [vmem:[%s2033 + $0xd0] sm:$0xff]
                %2088 = vst [vmem:[%s2034 + $0x160] sm:$0xff] %v2087
                %v2089 = vld [vmem:[%s2033 + $0xd8] sm:$0xff]
                %2090 = vst [vmem:[%s2034 + $0x1b0] sm:$0xff] %v2089
                %v2091 = vld [vmem:[%s2033 + $0xe0] sm:$0xff]
                %2092 = vst [vmem:[%s2034 + $0x1b8] sm:$0xff] %v2091
                %v2093 = vld [vmem:[%s2033 + $0xe8] sm:$0xff]
                %2094 = vst [vmem:[%s2034 + $0x1c0] sm:$0xff] %v2093
                %v2095 = vld [vmem:[%s2033 + $0xf0] sm:$0xff]
                %2096 = vst [vmem:[%s2034 + $0x1c8] sm:$0xff] %v2095
                %v2097 = vld [vmem:[%s2033 + $0xf8] sm:$0xff]
                %2098 = vst [vmem:[%s2034 + $0x1d0] sm:$0xff] %v2097
                %v2099 = vld [vmem:[%s2033 + $0x100] sm:$0xff]
                %2100 = vst [vmem:[%s2034 + $0x1d8] sm:$0xff] %v2099
                %v2101 = vld [vmem:[%s2033 + $0x108] sm:$0xff]
                %2102 = vst [vmem:[%s2034 + $0x1e0] sm:$0xff] %v2101
                %v2103 = vld [vmem:[%s2033 + $0x110] sm:$0xff]
                %2104 = vst [vmem:[%s2034 + $0x1e8] sm:$0xff] %v2103
                %v2105 = vld [vmem:[%s2033 + $0x118] sm:$0xff]
                %2106 = vst [vmem:[%s2034 + $0x1f0] sm:$0xff] %v2105
                %v2107 = vld [vmem:[%s2033 + $0x120] sm:$0xff]
                %2108 = vst [vmem:[%s2034 + $0x240] sm:$0xff] %v2107
                %v2109 = vld [vmem:[%s2033 + $0x128] sm:$0xff]
                %2110 = vst [vmem:[%s2034 + $0x248] sm:$0xff] %v2109
                %v2111 = vld [vmem:[%s2033 + $0x130] sm:$0xff]
                %2112 = vst [vmem:[%s2034 + $0x250] sm:$0xff] %v2111
                %v2113 = vld [vmem:[%s2033 + $0x138] sm:$0xff]
                %2114 = vst [vmem:[%s2034 + $0x258] sm:$0xff] %v2113
                %v2115 = vld [vmem:[%s2033 + $0x140] sm:$0xff]
                %2116 = vst [vmem:[%s2034 + $0x260] sm:$0xff] %v2115
                %v2117 = vld [vmem:[%s2033 + $0x148] sm:$0xff]
                %2118 = vst [vmem:[%s2034 + $0x268] sm:$0xff] %v2117
                %v2119 = vld [vmem:[%s2033 + $0x150] sm:$0xff]
                %2120 = vst [vmem:[%s2034 + $0x270] sm:$0xff] %v2119
                %v2121 = vld [vmem:[%s2033 + $0x158] sm:$0xff]
                %2122 = vst [vmem:[%s2034 + $0x278] sm:$0xff] %v2121
                %v2123 = vld [vmem:[%s2033 + $0x160] sm:$0xff]
                %2124 = vst [vmem:[%s2034 + $0x280] sm:$0xff] %v2123
                %v2125 = vld [vmem:[%s2033 + $0x168] sm:$0xff]
                %2126 = vst [vmem:[%s2034 + $0x2d0] sm:$0xff] %v2125
                %v2127 = vld [vmem:[%s2033 + $0x170] sm:$0xff]
                %2128 = vst [vmem:[%s2034 + $0x2d8] sm:$0xff] %v2127
                %v2129 = vld [vmem:[%s2033 + $0x178] sm:$0xff]
                %2130 = vst [vmem:[%s2034 + $0x2e0] sm:$0xff] %v2129
                %v2131 = vld [vmem:[%s2033 + $0x180] sm:$0xff]
                %2132 = vst [vmem:[%s2034 + $0x2e8] sm:$0xff] %v2131
                %v2133 = vld [vmem:[%s2033 + $0x188] sm:$0xff]
                %2134 = vst [vmem:[%s2034 + $0x2f0] sm:$0xff] %v2133
                %v2135 = vld [vmem:[%s2033 + $0x190] sm:$0xff]
                %2136 = vst [vmem:[%s2034 + $0x2f8] sm:$0xff] %v2135
                %v2137 = vld [vmem:[%s2033 + $0x198] sm:$0xff]
                %2138 = vst [vmem:[%s2034 + $0x300] sm:$0xff] %v2137
                %v2139 = vld [vmem:[%s2033 + $0x1a0] sm:$0xff]
                %2140 = vst [vmem:[%s2034 + $0x308] sm:$0xff] %v2139
                %v2141 = vld [vmem:[%s2033 + $0x1a8] sm:$0xff]
                %2142 = vst [vmem:[%s2034 + $0x310] sm:$0xff] %v2141
                %v2143 = vld [vmem:[%s2033 + $0x1b0] sm:$0xff]
                %2144 = vst [vmem:[%s2034 + $0x360] sm:$0xff] %v2143
                %v2145 = vld [vmem:[%s2033 + $0x1b8] sm:$0xff]
                %2146 = vst [vmem:[%s2034 + $0x368] sm:$0xff] %v2145
                %v2147 = vld [vmem:[%s2033 + $0x1c0] sm:$0xff]
                %2148 = vst [vmem:[%s2034 + $0x370] sm:$0xff] %v2147
                %v2149 = vld [vmem:[%s2033 + $0x1c8] sm:$0xff]
                %2150 = vst [vmem:[%s2034 + $0x378] sm:$0xff] %v2149
                %v2151 = vld [vmem:[%s2033 + $0x1d0] sm:$0xff]
                %2152 = vst [vmem:[%s2034 + $0x380] sm:$0xff] %v2151
                %v2153 = vld [vmem:[%s2033 + $0x1d8] sm:$0xff]
                %2154 = vst [vmem:[%s2034 + $0x388] sm:$0xff] %v2153
                %v2155 = vld [vmem:[%s2033 + $0x1e0] sm:$0xff]
                %2156 = vst [vmem:[%s2034 + $0x390] sm:$0xff] %v2155
                %v2157 = vld [vmem:[%s2033 + $0x1e8] sm:$0xff]
                %2158 = vst [vmem:[%s2034 + $0x398] sm:$0xff] %v2157
                %v2159 = vld [vmem:[%s2033 + $0x1f0] sm:$0xff]
                %2160 = vst [vmem:[%s2034 + $0x3a0] sm:$0xff] %v2159
              $region53: #{fused_add_conv1x1.1} parent=47 // loop_footer
                %s2032 = sadd.s32 1, %s2028
              $region54: #{fused_add_conv1x1.1} parent=47 // loop_footer_branch
                %2027 = sbr.rel target = $region50
              $region55: #{fused_add_conv1x1.1} parent=47 // loop_exit
                _
            $region48: #{fused_add_conv1x1.1} parent=43 // pred_fallthru
              _
            // Predicated region
            $region56: #{fused_add_conv1x1.1} parent=43 // pred_check
              _
            $region57: #{fused_add_conv1x1.1} parent=43 // pred_check_branch
              %2162 = sbr.rel target = $region59
            $region58: #{fused_add_conv1x1.1} parent=43 // pred_region
              _
            $region59: #{fused_add_conv1x1.1} parent=43 // pred_fallthru
              _
          $region44: #{fused_add_conv1x1.1} parent=39 // pred_fallthru
            _
          %2163 = vnop
        $region40: #{fused_add_conv1x1.1} parent=31 // pred_fallthru
          _
      $region32: #{fused_add_conv1x1.1} parent=5 // pred_fallthru
        _
      %p2164 = scmp.le.s32.totalorder 2, %s12
      // Predicated region
      $region60: #{fused_add_conv1x1.1} parent=5 // pred_check
        %p2165 = pneg %p2164
      $region61: #{fused_add_conv1x1.1} parent=5 // pred_check_branch
        %2167 = sbr.rel (%p2165) target = $region63
      $region62: #{fused_add_conv1x1.1} parent=5 // pred_region
        %s2168 = ssub.s32 %s12, 2
        // Predicated region
        $region64: #{fused_add_conv1x1.1} parent=62 // pred_check
          %p2169 = pneg %p109
        $region65: #{fused_add_conv1x1.1} parent=62 // pred_check_branch
          %2171 = sbr.rel (%p2169) target = $region67
        $region66: #{fused_add_conv1x1.1} parent=62 // pred_region
          %s2172 = sand.u32 %s94, 1
          %s2173 = sand.u32 %s94, 1
          %s2174 = smul.addr %s2173, 504
          %s2175 = scalar_lea.vmem [#allocation4], %s2174
        $region67: #{fused_add_conv1x1.1} parent=62 // pred_fallthru
          _
      $region63: #{fused_add_conv1x1.1} parent=5 // pred_fallthru
        _
    $region6: #{fused_add_conv1x1.1} parent=1 // loop_footer
      %s16 = sadd.s32 1, %s12
    $region7: #{fused_add_conv1x1.1} parent=1 // loop_footer_branch
      %11 = sbr.rel target = $region3
    $region8: #{fused_add_conv1x1.1} parent=1 // loop_exit
      _
    %2176 = vsyncpa [#allocation3], 1
    %s2177 = scalar_lea.sflag [#allocation3], 1
    %2178 = vsyncpa %s2177, 1

</llo_original>
